<compile_context>
chip_gen: v6e
topology: v6e:2x2x1
jax: 0.10.0
libtpu: 0.0.40
codegen_flags: <defaults>
</compile_context>

<pallas_src>
import jax
import jax.numpy as jnp
from jax.experimental import pallas as pl
from jax.experimental.pallas import tpu as pltpu


_NEG_PAD = -1e9  # bias for lane-padded (fake) output classes; exp() -> 0


def _round_up(n, m):
    return ((n + m - 1) // m) * m


def char_rnn_kernel(x_ref, w_ih_t_ref, w_hh_t_ref, b_ref, w_ho_t_ref,
                    b_ho_ref, out_ref):
    """Forward for ONE batch tile of Bt sequences (weights VMEM-resident).

    x_ref     : (S, Bt, I)  one-hot characters, timestep-major
    w_ih_t_ref: (I, H)      W_ih^T   (pre-transposed in wrapper)
    w_hh_t_ref: (H, H)      W_hh^T   (pre-transposed in wrapper)
    b_ref     : (1, H)      b_ih + b_hh (folded in wrapper, f32)
    w_ho_t_ref: (H, OP)     W_ho^T, lane-padded to OP with zero columns
    b_ho_ref  : (1, OP)     b_ho, padded entries = -1e9
    out_ref   : (Bt, OP)    log-probabilities (padded classes are junk)
    """
    S, Bt, _ = x_ref.shape
    H = w_hh_t_ref.shape[0]

    # Resident weights, loaded once per tile and reused every timestep.
    w_ih_t = w_ih_t_ref[...]                       # (I, H)
    w_hh_t = w_hh_t_ref[...]                       # (H, H)
    # Hoist the bias broadcast out of the unrolled loop (no CSE in JAX).
    b_full = jnp.broadcast_to(b_ref[...], (Bt, H)).astype(jnp.float32)

    # Fully unrolled recurrence (S is static & small).  Each step is two MXU
    # matmuls with M = Bt; tanh stays f32 (no bf16 EUP on v5e).
    h = jnp.zeros((Bt, H), jnp.float32)
    for t in range(S):
        xt = x_ref[t]                              # (Bt, I) leading-axis slice
        pre = (jnp.dot(xt, w_ih_t, preferred_element_type=jnp.float32)
               + jnp.dot(h.astype(w_hh_t.dtype), w_hh_t,
                         preferred_element_type=jnp.float32)
               + b_full)
        h = jnp.tanh(pre)                          # (Bt, H) f32

    # h2o Linear + LogSoftmax(dim=1), numerically stable.  Padded classes
    # contribute logits of -1e9 -> exp underflows to 0, max/sum unaffected.
    logits = (jnp.dot(h.astype(w_ho_t_ref.dtype), w_ho_t_ref[...],
                      preferred_element_type=jnp.float32)
              + b_ho_ref[...])                     # (Bt, OP) f32
    m = jnp.max(logits, axis=1, keepdims=True)
    lse = jnp.log(jnp.sum(jnp.exp(logits - m), axis=1, keepdims=True)) + m
    out_ref[...] = logits - lse                    # lane-dense (Bt, OP) store


def char_rnn_forward_batch(x, w_ih, w_hh, b_ih, b_hh, w_ho, b_ho,
                           *, bt=128, mxu_dtype=jnp.float32):
    """x: (B, S, I) float32 one-hot. Returns (B, O) log-probabilities.

    bt        : batch-tile size (MXU M dimension). 128 suits v5e; 256+ suits
                v6e/v7x when B is large.  Clamped / rounded to a multiple of 8.
    mxu_dtype : dtype fed to the MXU (jnp.bfloat16 for ~3x MXU throughput on
                v6e/v7x; keep jnp.float32 for tight numerical checks).
    """
    B, S, I = x.shape
    H = w_hh.shape[0]
    O = w_ho.shape[0]

    # ---- tile sizing (batch is the only free MXU axis; H is fixed at 128) --
    bt = max(8, min(_round_up(bt, 8), _round_up(B, 8)))
    B_pad = _round_up(B, bt)
    OP = _round_up(O, 128)                 # lane-pad classes -> dense stores
    n_tiles = B_pad // bt

    # ---- wrapper-side layout plumbing (free in XLA) ------------------------
    # timestep-major x so in-kernel per-step slices are leading-axis slices.
    x_t = jnp.transpose(x, (1, 0, 2))                          # (S, B, I)
    x_t = jnp.pad(x_t, ((0, 0), (0, B_pad - B), (0, 0)))       # (S, B_pad, I)
    x_t = x_t.astype(mxu_dtype)

    w_ih_t = w_ih.T.astype(mxu_dtype)                          # (I, H)
    w_hh_t = w_hh.T.astype(mxu_dtype)                          # (H, H)
    b = (b_ih + b_hh).reshape(1, H).astype(jnp.float32)        # (1, H)
    w_ho_t = jnp.pad(w_ho.T, ((0, 0), (0, OP - O))).astype(mxu_dtype)  # (H, OP)
    b_ho_p = jnp.pad(b_ho.reshape(1, O), ((0, 0), (0, OP - O)),
                     constant_values=_NEG_PAD).astype(jnp.float32)     # (1, OP)

    out = pl.pallas_call(
        char_rnn_kernel,
        out_shape=jax.ShapeDtypeStruct((B_pad, OP), jnp.float32),
        grid_spec=pltpu.PrefetchScalarGridSpec(
            num_scalar_prefetch=0,
            grid=(n_tiles,),
            in_specs=[
                pl.BlockSpec((S, bt, I), lambda i: (0, i, 0)),  # batch tile
                pl.BlockSpec((I, H), lambda i: (0, 0)),         # resident
                pl.BlockSpec((H, H), lambda i: (0, 0)),         # resident
                pl.BlockSpec((1, H), lambda i: (0, 0)),         # resident
                pl.BlockSpec((H, OP), lambda i: (0, 0)),        # resident
                pl.BlockSpec((1, OP), lambda i: (0, 0)),        # resident
            ],
            out_specs=pl.BlockSpec((bt, OP), lambda i: (i, 0)),
        ),
        compiler_params=pltpu.CompilerParams(
            # Batch tiles are independent -> shards across the 2 TCs on v7x.
            dimension_semantics=("parallel",),
        ),
    )(x_t, w_ih_t, w_hh_t, b, w_ho_t, b_ho_p)

    return out[:B, :O]


def char_rnn_forward(x, w_ih, w_hh, b_ih, b_hh, w_ho, b_ho):
    """Single-sequence forward matching PyTorch CharRNN.forward.

    x: (S, I) float32 (line_tensor with the batch=1 axis squeezed).
    Returns (1, O) log-probabilities, like the PyTorch module.
    """
    return char_rnn_forward_batch(x[None], w_ih, w_hh, b_ih, b_hh, w_ho, b_ho)


# ----------------------------- references ----------------------------------

def reference_forward(x, w_ih, w_hh, b_ih, b_hh, w_ho, b_ho):
    """Pure-JAX reference mirroring torch.nn.RNN + Linear + LogSoftmax."""
    H = w_hh.shape[0]
    h = jnp.zeros((1, H), jnp.float32)
    for t in range(x.shape[0]):
        h = jnp.tanh(x[t:t + 1] @ w_ih.T + b_ih + h @ w_hh.T + b_hh)
    logits = h @ w_ho.T + b_ho
    return jax.nn.log_softmax(logits, axis=1)


def reference_forward_batch(x, w_ih, w_hh, b_ih, b_hh, w_ho, b_ho):
    """Batched pure-JAX reference. x: (B, S, I) -> (B, O)."""
    B, S, _ = x.shape
    H = w_hh.shape[0]
    h = jnp.zeros((B, H), jnp.float32)
    for t in range(S):
        h = jnp.tanh(x[:, t, :] @ w_ih.T + b_ih + h @ w_hh.T + b_hh)
    logits = h @ w_ho.T + b_ho
    return jax.nn.log_softmax(logits, axis=1)


if __name__ == "__main__":
    # Shapes implied by the module: n_letters = 58, n_hidden = 128,
    # n_classes = 18 (names-dataset languages).  Sequence length = 8; one
    # single-name call plus a batched call over 32 names (2 batch tiles).
    n_letters = 58
    n_hidden = 128
    n_classes = 18
    seq_len = 8
    n_names = 32

    key = jax.random.PRNGKey(0)
    k_x, k_xb, k1, k2, k3, k4, k5, k6 = jax.random.split(key, 8)

    # Deterministic one-hot "line tensors" (like lineToTensor), batch squeezed.
    char_idx = jax.random.randint(k_x, (seq_len,), 0, n_letters)
    x = jax.nn.one_hot(char_idx, n_letters, dtype=jnp.float32)         # (S, I)
    batch_idx = jax.random.randint(k_xb, (n_names, seq_len), 0, n_letters)
    x_batch = jax.nn.one_hot(batch_idx, n_letters, dtype=jnp.float32)  # (B,S,I)

    # PyTorch-style uniform(-1/sqrt(H), 1/sqrt(H)) init, deterministic.
    bound = 1.0 / (n_hidden ** 0.5)
    w_ih = jax.random.uniform(k1, (n_hidden, n_letters), jnp.float32, -bound, bound)
    w_hh = jax.random.uniform(k2, (n_hidden, n_hidden), jnp.float32, -bound, bound)
    b_ih = jax.random.uniform(k3, (n_hidden,), jnp.float32, -bound, bound)
    b_hh = jax.random.uniform(k4, (n_hidden,), jnp.float32, -bound, bound)
    w_ho = jax.random.uniform(k5, (n_classes, n_hidden), jnp.float32, -bound, bound)
    b_ho = jax.random.uniform(k6, (n_classes,), jnp.float32, -bound, bound)

    # Single-sequence forward (matches the PyTorch module's forward exactly).
    out = char_rnn_forward(x, w_ih, w_hh, b_ih, b_hh, w_ho, b_ho)
    out = jax.block_until_ready(out)
    ref = reference_forward(x, w_ih, w_hh, b_ih, b_hh, w_ho, b_ho)
    assert out.shape == (1, n_classes)
    assert jnp.allclose(out, ref, atol=1e-5, rtol=1e-5), "single-seq mismatch"

    # Batch-tiled forward: 32 names, Bt=16 -> grid=(2,) parallel batch tiles.
    out_b = char_rnn_forward_batch(x_batch, w_ih, w_hh, b_ih, b_hh, w_ho, b_ho,
                                   bt=16)
    out_b = jax.block_until_ready(out_b)
    ref_b = reference_forward_batch(x_batch, w_ih, w_hh, b_ih, b_hh, w_ho, b_ho)
    assert out_b.shape == (n_names, n_classes)
    assert jnp.allclose(out_b, ref_b, atol=1e-5, rtol=1e-5), "batched mismatch"

    print("KERNEL_OK")
</pallas_src>

<mosaic_0001>
module attributes {stable_mosaic.version = 11 : i64} {
  func.func @char_rnn_kernel(%arg0: i32, %arg1: memref<8x8x58xf32, #tpu.memory_space<vmem>>, %arg2: memref<58x128xf32, #tpu.memory_space<vmem>>, %arg3: memref<128x128xf32, #tpu.memory_space<vmem>>, %arg4: memref<1x128xf32, #tpu.memory_space<vmem>>, %arg5: memref<128x128xf32, #tpu.memory_space<vmem>>, %arg6: memref<1x128xf32, #tpu.memory_space<vmem>>, %arg7: memref<8x128xf32, #tpu.memory_space<vmem>>) attributes {dimension_semantics = [#tpu.dimension_semantics<parallel>], iteration_bounds = array<i64: 1>, scalar_prefetch = 0 : i64, scratch_operands = 0 : i64, tpu.core_type = #tpu.core_type<tc>, window_params = [{transform_indices = @transform_0, window_bounds = array<i64: 8, 8, 58>}, {pipeline_mode = #tpu.pipeline_mode<synchronous>, transform_indices = @transform_1, window_bounds = array<i64: 58, 128>}, {pipeline_mode = #tpu.pipeline_mode<synchronous>, transform_indices = @transform_2, window_bounds = array<i64: 128, 128>}, {pipeline_mode = #tpu.pipeline_mode<synchronous>, transform_indices = @transform_3, window_bounds = array<i64: 1, 128>}, {pipeline_mode = #tpu.pipeline_mode<synchronous>, transform_indices = @transform_4, window_bounds = array<i64: 128, 128>}, {pipeline_mode = #tpu.pipeline_mode<synchronous>, transform_indices = @transform_5, window_bounds = array<i64: 1, 128>}, {transform_indices = @transform_6, window_bounds = array<i64: 8, 128>}]} {
    %c0 = arith.constant 0 : index
    %c0_0 = arith.constant 0 : index
    %0 = vector.load %arg2[%c0, %c0_0] : memref<58x128xf32, #tpu.memory_space<vmem>>, vector<58x128xf32>
    %c0_1 = arith.constant 0 : index
    %c0_2 = arith.constant 0 : index
    %1 = vector.load %arg3[%c0_1, %c0_2] : memref<128x128xf32, #tpu.memory_space<vmem>>, vector<128x128xf32>
    %c0_3 = arith.constant 0 : index
    %c0_4 = arith.constant 0 : index
    %2 = vector.load %arg4[%c0_3, %c0_4] : memref<1x128xf32, #tpu.memory_space<vmem>>, vector<1x128xf32>
    %3 = vector.shape_cast %2 : vector<1x128xf32> to vector<1x128xf32>
    %4 = vector.broadcast %3 : vector<1x128xf32> to vector<8x128xf32>
    %cst = arith.constant 0.000000e+00 : f32
    %5 = vector.broadcast %cst : f32 to vector<8x128xf32>
    %c0_5 = arith.constant 0 : index
    %c0_6 = arith.constant 0 : index
    %c0_7 = arith.constant 0 : index
    %6 = vector.load %arg1[%c0_5, %c0_6, %c0_7] : memref<8x8x58xf32, #tpu.memory_space<vmem>>, vector<1x8x58xf32>
    %7 = vector.shape_cast %6 : vector<1x8x58xf32> to vector<8x58xf32>
    %cst_8 = arith.constant dense<0.000000e+00> : vector<8x128xf32>
    %8 = tpu.matmul %7, %0, %cst_8 {dimension_numbers = #tpu.dot_dimension_numbers<[1], [0], [0], [1], [0, 0, 1, 1], [], []>} : vector<8x58xf32>, vector<58x128xf32>, vector<8x128xf32> -> vector<8x128xf32>
    %cst_9 = arith.constant dense<0.000000e+00> : vector<8x128xf32>
    %9 = tpu.matmul %5, %1, %cst_9 {dimension_numbers = #tpu.dot_dimension_numbers<[1], [0], [0], [1], [0, 0, 1, 1], [], []>} : vector<8x128xf32>, vector<128x128xf32>, vector<8x128xf32> -> vector<8x128xf32>
    %10 = arith.addf %8, %9 : vector<8x128xf32>
    %11 = arith.addf %10, %4 : vector<8x128xf32>
    %12 = math.tanh %11 : vector<8x128xf32>
    %c1 = arith.constant 1 : index
    %c0_10 = arith.constant 0 : index
    %c0_11 = arith.constant 0 : index
    %13 = vector.load %arg1[%c1, %c0_10, %c0_11] : memref<8x8x58xf32, #tpu.memory_space<vmem>>, vector<1x8x58xf32>
    %14 = vector.shape_cast %13 : vector<1x8x58xf32> to vector<8x58xf32>
    %cst_12 = arith.constant dense<0.000000e+00> : vector<8x128xf32>
    %15 = tpu.matmul %14, %0, %cst_12 {dimension_numbers = #tpu.dot_dimension_numbers<[1], [0], [0], [1], [0, 0, 1, 1], [], []>} : vector<8x58xf32>, vector<58x128xf32>, vector<8x128xf32> -> vector<8x128xf32>
    %cst_13 = arith.constant dense<0.000000e+00> : vector<8x128xf32>
    %16 = tpu.matmul %12, %1, %cst_13 {dimension_numbers = #tpu.dot_dimension_numbers<[1], [0], [0], [1], [0, 0, 1, 1], [], []>} : vector<8x128xf32>, vector<128x128xf32>, vector<8x128xf32> -> vector<8x128xf32>
    %17 = arith.addf %15, %16 : vector<8x128xf32>
    %18 = arith.addf %17, %4 : vector<8x128xf32>
    %19 = math.tanh %18 : vector<8x128xf32>
    %c2 = arith.constant 2 : index
    %c0_14 = arith.constant 0 : index
    %c0_15 = arith.constant 0 : index
    %20 = vector.load %arg1[%c2, %c0_14, %c0_15] : memref<8x8x58xf32, #tpu.memory_space<vmem>>, vector<1x8x58xf32>
    %21 = vector.shape_cast %20 : vector<1x8x58xf32> to vector<8x58xf32>
    %cst_16 = arith.constant dense<0.000000e+00> : vector<8x128xf32>
    %22 = tpu.matmul %21, %0, %cst_16 {dimension_numbers = #tpu.dot_dimension_numbers<[1], [0], [0], [1], [0, 0, 1, 1], [], []>} : vector<8x58xf32>, vector<58x128xf32>, vector<8x128xf32> -> vector<8x128xf32>
    %cst_17 = arith.constant dense<0.000000e+00> : vector<8x128xf32>
    %23 = tpu.matmul %19, %1, %cst_17 {dimension_numbers = #tpu.dot_dimension_numbers<[1], [0], [0], [1], [0, 0, 1, 1], [], []>} : vector<8x128xf32>, vector<128x128xf32>, vector<8x128xf32> -> vector<8x128xf32>
    %24 = arith.addf %22, %23 : vector<8x128xf32>
    %25 = arith.addf %24, %4 : vector<8x128xf32>
    %26 = math.tanh %25 : vector<8x128xf32>
    %c3 = arith.constant 3 : index
    %c0_18 = arith.constant 0 : index
    %c0_19 = arith.constant 0 : index
    %27 = vector.load %arg1[%c3, %c0_18, %c0_19] : memref<8x8x58xf32, #tpu.memory_space<vmem>>, vector<1x8x58xf32>
    %28 = vector.shape_cast %27 : vector<1x8x58xf32> to vector<8x58xf32>
    %cst_20 = arith.constant dense<0.000000e+00> : vector<8x128xf32>
    %29 = tpu.matmul %28, %0, %cst_20 {dimension_numbers = #tpu.dot_dimension_numbers<[1], [0], [0], [1], [0, 0, 1, 1], [], []>} : vector<8x58xf32>, vector<58x128xf32>, vector<8x128xf32> -> vector<8x128xf32>
    %cst_21 = arith.constant dense<0.000000e+00> : vector<8x128xf32>
    %30 = tpu.matmul %26, %1, %cst_21 {dimension_numbers = #tpu.dot_dimension_numbers<[1], [0], [0], [1], [0, 0, 1, 1], [], []>} : vector<8x128xf32>, vector<128x128xf32>, vector<8x128xf32> -> vector<8x128xf32>
    %31 = arith.addf %29, %30 : vector<8x128xf32>
    %32 = arith.addf %31, %4 : vector<8x128xf32>
    %33 = math.tanh %32 : vector<8x128xf32>
    %c4 = arith.constant 4 : index
    %c0_22 = arith.constant 0 : index
    %c0_23 = arith.constant 0 : index
    %34 = vector.load %arg1[%c4, %c0_22, %c0_23] : memref<8x8x58xf32, #tpu.memory_space<vmem>>, vector<1x8x58xf32>
    %35 = vector.shape_cast %34 : vector<1x8x58xf32> to vector<8x58xf32>
    %cst_24 = arith.constant dense<0.000000e+00> : vector<8x128xf32>
    %36 = tpu.matmul %35, %0, %cst_24 {dimension_numbers = #tpu.dot_dimension_numbers<[1], [0], [0], [1], [0, 0, 1, 1], [], []>} : vector<8x58xf32>, vector<58x128xf32>, vector<8x128xf32> -> vector<8x128xf32>
    %cst_25 = arith.constant dense<0.000000e+00> : vector<8x128xf32>
    %37 = tpu.matmul %33, %1, %cst_25 {dimension_numbers = #tpu.dot_dimension_numbers<[1], [0], [0], [1], [0, 0, 1, 1], [], []>} : vector<8x128xf32>, vector<128x128xf32>, vector<8x128xf32> -> vector<8x128xf32>
    %38 = arith.addf %36, %37 : vector<8x128xf32>
    %39 = arith.addf %38, %4 : vector<8x128xf32>
    %40 = math.tanh %39 : vector<8x128xf32>
    %c5 = arith.constant 5 : index
    %c0_26 = arith.constant 0 : index
    %c0_27 = arith.constant 0 : index
    %41 = vector.load %arg1[%c5, %c0_26, %c0_27] : memref<8x8x58xf32, #tpu.memory_space<vmem>>, vector<1x8x58xf32>
    %42 = vector.shape_cast %41 : vector<1x8x58xf32> to vector<8x58xf32>
    %cst_28 = arith.constant dense<0.000000e+00> : vector<8x128xf32>
    %43 = tpu.matmul %42, %0, %cst_28 {dimension_numbers = #tpu.dot_dimension_numbers<[1], [0], [0], [1], [0, 0, 1, 1], [], []>} : vector<8x58xf32>, vector<58x128xf32>, vector<8x128xf32> -> vector<8x128xf32>
    %cst_29 = arith.constant dense<0.000000e+00> : vector<8x128xf32>
    %44 = tpu.matmul %40, %1, %cst_29 {dimension_numbers = #tpu.dot_dimension_numbers<[1], [0], [0], [1], [0, 0, 1, 1], [], []>} : vector<8x128xf32>, vector<128x128xf32>, vector<8x128xf32> -> vector<8x128xf32>
    %45 = arith.addf %43, %44 : vector<8x128xf32>
    %46 = arith.addf %45, %4 : vector<8x128xf32>
    %47 = math.tanh %46 : vector<8x128xf32>
    %c6 = arith.constant 6 : index
    %c0_30 = arith.constant 0 : index
    %c0_31 = arith.constant 0 : index
    %48 = vector.load %arg1[%c6, %c0_30, %c0_31] : memref<8x8x58xf32, #tpu.memory_space<vmem>>, vector<1x8x58xf32>
    %49 = vector.shape_cast %48 : vector<1x8x58xf32> to vector<8x58xf32>
    %cst_32 = arith.constant dense<0.000000e+00> : vector<8x128xf32>
    %50 = tpu.matmul %49, %0, %cst_32 {dimension_numbers = #tpu.dot_dimension_numbers<[1], [0], [0], [1], [0, 0, 1, 1], [], []>} : vector<8x58xf32>, vector<58x128xf32>, vector<8x128xf32> -> vector<8x128xf32>
    %cst_33 = arith.constant dense<0.000000e+00> : vector<8x128xf32>
    %51 = tpu.matmul %47, %1, %cst_33 {dimension_numbers = #tpu.dot_dimension_numbers<[1], [0], [0], [1], [0, 0, 1, 1], [], []>} : vector<8x128xf32>, vector<128x128xf32>, vector<8x128xf32> -> vector<8x128xf32>
    %52 = arith.addf %50, %51 : vector<8x128xf32>
    %53 = arith.addf %52, %4 : vector<8x128xf32>
    %54 = math.tanh %53 : vector<8x128xf32>
    %c7 = arith.constant 7 : index
    %c0_34 = arith.constant 0 : index
    %c0_35 = arith.constant 0 : index
    %55 = vector.load %arg1[%c7, %c0_34, %c0_35] : memref<8x8x58xf32, #tpu.memory_space<vmem>>, vector<1x8x58xf32>
    %56 = vector.shape_cast %55 : vector<1x8x58xf32> to vector<8x58xf32>
    %cst_36 = arith.constant dense<0.000000e+00> : vector<8x128xf32>
    %57 = tpu.matmul %56, %0, %cst_36 {dimension_numbers = #tpu.dot_dimension_numbers<[1], [0], [0], [1], [0, 0, 1, 1], [], []>} : vector<8x58xf32>, vector<58x128xf32>, vector<8x128xf32> -> vector<8x128xf32>
    %cst_37 = arith.constant dense<0.000000e+00> : vector<8x128xf32>
    %58 = tpu.matmul %54, %1, %cst_37 {dimension_numbers = #tpu.dot_dimension_numbers<[1], [0], [0], [1], [0, 0, 1, 1], [], []>} : vector<8x128xf32>, vector<128x128xf32>, vector<8x128xf32> -> vector<8x128xf32>
    %59 = arith.addf %57, %58 : vector<8x128xf32>
    %60 = arith.addf %59, %4 : vector<8x128xf32>
    %61 = math.tanh %60 : vector<8x128xf32>
    %c0_38 = arith.constant 0 : index
    %c0_39 = arith.constant 0 : index
    %62 = vector.load %arg5[%c0_38, %c0_39] : memref<128x128xf32, #tpu.memory_space<vmem>>, vector<128x128xf32>
    %cst_40 = arith.constant dense<0.000000e+00> : vector<8x128xf32>
    %63 = tpu.matmul %61, %62, %cst_40 {dimension_numbers = #tpu.dot_dimension_numbers<[1], [0], [0], [1], [0, 0, 1, 1], [], []>} : vector<8x128xf32>, vector<128x128xf32>, vector<8x128xf32> -> vector<8x128xf32>
    %c0_41 = arith.constant 0 : index
    %c0_42 = arith.constant 0 : index
    %64 = vector.load %arg6[%c0_41, %c0_42] : memref<1x128xf32, #tpu.memory_space<vmem>>, vector<1x128xf32>
    %65 = vector.broadcast %64 : vector<1x128xf32> to vector<8x128xf32>
    %66 = arith.addf %63, %65 : vector<8x128xf32>
    %cst_43 = arith.constant dense<0xFF800000> : vector<8xf32>
    %67 = vector.multi_reduction <maximumf>, %66, %cst_43 [1] : vector<8x128xf32> to vector<8xf32>
    %68 = vector.shape_cast %67 : vector<8xf32> to vector<8x1xf32>
    %69 = vector.broadcast %68 : vector<8x1xf32> to vector<8x128xf32>
    %70 = arith.subf %66, %69 : vector<8x128xf32>
    %71 = math.exp %70 : vector<8x128xf32>
    %cst_44 = arith.constant dense<0.000000e+00> : vector<8xf32>
    %72 = vector.multi_reduction <add>, %71, %cst_44 [1] : vector<8x128xf32> to vector<8xf32>
    %73 = vector.shape_cast %72 : vector<8xf32> to vector<8x1xf32>
    %74 = math.log %73 : vector<8x1xf32>
    %75 = arith.addf %74, %68 : vector<8x1xf32>
    %76 = vector.broadcast %75 : vector<8x1xf32> to vector<8x128xf32>
    %77 = arith.subf %66, %76 : vector<8x128xf32>
    %c0_45 = arith.constant 0 : index
    %c0_46 = arith.constant 0 : index
    %78 = vector.load %arg7[%c0_45, %c0_46] : memref<8x128xf32, #tpu.memory_space<vmem>>, vector<8x128xf32>
    tpu.vector_store %arg7[%c0_45, %c0_46], %77 {strides = array<i32>} : memref<8x128xf32, #tpu.memory_space<vmem>>, vector<8x128xf32>,
    return
  }
  func.func @transform_0(%arg0: i32) -> (i32, i32, i32) {
    %c0_i32 = arith.constant 0 : i32
    %c0_i32_0 = arith.constant 0 : i32
    %c0_i32_1 = arith.constant 0 : i32
    return %c0_i32, %arg0, %c0_i32_0 : i32, i32, i32
  }
  func.func @transform_1(%arg0: i32) -> (i32, i32) {
    %c0_i32 = arith.constant 0 : i32
    %c0_i32_0 = arith.constant 0 : i32
    %c0_i32_1 = arith.constant 0 : i32
    return %c0_i32, %c0_i32_0 : i32, i32
  }
  func.func @transform_2(%arg0: i32) -> (i32, i32) {
    %c0_i32 = arith.constant 0 : i32
    %c0_i32_0 = arith.constant 0 : i32
    %c0_i32_1 = arith.constant 0 : i32
    return %c0_i32, %c0_i32_0 : i32, i32
  }
  func.func @transform_3(%arg0: i32) -> (i32, i32) {
    %c0_i32 = arith.constant 0 : i32
    %c0_i32_0 = arith.constant 0 : i32
    %c0_i32_1 = arith.constant 0 : i32
    return %c0_i32, %c0_i32_0 : i32, i32
  }
  func.func @transform_4(%arg0: i32) -> (i32, i32) {
    %c0_i32 = arith.constant 0 : i32
    %c0_i32_0 = arith.constant 0 : i32
    %c0_i32_1 = arith.constant 0 : i32
    return %c0_i32, %c0_i32_0 : i32, i32
  }
  func.func @transform_5(%arg0: i32) -> (i32, i32) {
    %c0_i32 = arith.constant 0 : i32
    %c0_i32_0 = arith.constant 0 : i32
    %c0_i32_1 = arith.constant 0 : i32
    return %c0_i32, %c0_i32_0 : i32, i32
  }
  func.func @transform_6(%arg0: i32) -> (i32, i32) {
    %c0_i32 = arith.constant 0 : i32
    %c0_i32_0 = arith.constant 0 : i32
    return %arg0, %c0_i32 : i32, i32
  }
}

</mosaic_0001>

<llo_original>
// kernel: tpu_custom_call.1
$region0: #{tpu_custom_call.1}
  #allocation0 [shape = 'u32[]', space=smem, size = 0x4, offset = 0x4, fixed_abs, tag = 'smem constant byte address 0x4 - core index']
  #allocation1 [shape = 'u32[144,128]{1,0:T(1,128)}', space=vmem, size = 0x12000, scoped, tag = 'internal scratch']
  %s0 = inlined_call_operand.hbm [shape: f32[8,8,58], index: 0, kind: input, shape index: {}]
  %s1 = inlined_call_operand.hbm [shape: f32[58,128], index: 1, kind: input, shape index: {}]
  %s2 = inlined_call_operand.hbm [shape: f32[128,128], index: 2, kind: input, shape index: {}]
  %s3 = inlined_call_operand.vmem [shape: f32[1,128], index: 3, kind: input, shape index: {}]
  %s4 = inlined_call_operand.hbm [shape: f32[128,128], index: 4, kind: input, shape index: {}]
  %s5 = inlined_call_operand.vmem [shape: f32[1,128], index: 5, kind: input, shape index: {}]
  %s6 = inlined_call_operand.hbm [shape: f32[8,128], index: 6, kind: output, shape index: {}]
  %s7 = sld [smem:[#allocation0]]
  $region50: #{tpu_custom_call.1} parent=0
    _
  %s9 = ssub.s32 1, %s7
  %s10 = scalar_select 0, %s9, %s7
  $region1: #{tpu_custom_call.1} parent=0
    #allocation2 [shape = 'u8[32768]{0}', space=vmem, size = 0x8000, scoped, tag = 'input window, operand 0, single buffered']
    #allocation3 [shape = 's32[1]{0}', space=sflag, size = 0x4, scoped, tag = 'scoped memory for tpu_custom_call.1']
    #allocation4 [shape = 's32[1]{0}', space=sflag, size = 0x4, scoped, tag = 'scoped memory for tpu_custom_call.1']
    #allocation5 [shape = 'u8[32768]{0}', space=vmem, size = 0x8000, scoped, tag = 'input window, operand 1, single buffered']
    #allocation6 [shape = 's32[1]{0}', space=sflag, size = 0x4, scoped, tag = 'scoped memory for tpu_custom_call.1']
    #allocation7 [shape = 'u8[65536]{0}', space=vmem, size = 0x10000, scoped, tag = 'input window, operand 2, single buffered']
    #allocation8 [shape = 'u8[65536]{0}', space=vmem, size = 0x10000, scoped, tag = 'input window, operand 4, single buffered']
    #allocation9 [shape = 's32[1]{0}', space=sflag, size = 0x4, scoped, tag = 'scoped memory for tpu_custom_call.1']
    #allocation10 [shape = 'u8[4096]{0}', space=vmem, size = 0x1000, scoped, tag = 'output window, operand 0, single buffered']
    %11 = vsyncpa [#allocation3], 0
    %12 = vsyncpa [#allocation6], 0
    %13 = vsyncpa [#allocation9], 0
    %14 = vsyncpa [#allocation4], 0
    // Predicated region
    $region2: #{tpu_custom_call.1} parent=1 // pred_check
      _
    $region3: #{tpu_custom_call.1} parent=1 // pred_check_branch
      %16 = sbr.rel (0) target = $region5
    $region4: #{tpu_custom_call.1} parent=1 // pred_region
      %s18 = ssub.s32 1024, 1024
      %19 = vsyncadd [#allocation3], %s18
      %s20 = sshll.u32 [#allocation2], 4
      %s21 = int_to_ptr.vmem [resolvable:$true] %s20
      %26 = dma.hbm_to_vmem [thread:$0]  %s0, 1024, %s21, [#allocation3], 128, 128, 8
    $region5: #{tpu_custom_call.1} parent=1 // pred_fallthru
      _
    // Predicated region
    $region6: #{tpu_custom_call.1} parent=1 // pred_check
      _
    $region7: #{tpu_custom_call.1} parent=1 // pred_check_branch
      %28 = sbr.rel (0) target = $region9
    $region8: #{tpu_custom_call.1} parent=1 // pred_region
      %s30 = ssub.s32 1024, 1024
      %31 = vsyncadd [#allocation6], %s30
      %s32 = sshll.u32 [#allocation5], 4
      %s33 = int_to_ptr.vmem [resolvable:$true] %s32
      %38 = dma.hbm_to_vmem [thread:$0]  %s1, 1024, %s33, [#allocation6], 128, 128, 8
    $region9: #{tpu_custom_call.1} parent=1 // pred_fallthru
      _
    // Predicated region
    $region10: #{tpu_custom_call.1} parent=1 // pred_check
      _
    $region11: #{tpu_custom_call.1} parent=1 // pred_check_branch
      %40 = sbr.rel (0) target = $region13
    $region12: #{tpu_custom_call.1} parent=1 // pred_region
      %s42 = ssub.s32 2048, 2048
      %43 = vsyncadd [#allocation6], %s42
      %s44 = sshll.u32 [#allocation7], 4
      %s45 = int_to_ptr.vmem [resolvable:$true] %s44
      %50 = dma.hbm_to_vmem [thread:$0]  %s2, 2048, %s45, [#allocation6], 128, 128, 8
    $region13: #{tpu_custom_call.1} parent=1 // pred_fallthru
      _
    // Predicated region
    $region14: #{tpu_custom_call.1} parent=1 // pred_check
      _
    $region15: #{tpu_custom_call.1} parent=1 // pred_check_branch
      %52 = sbr.rel (0) target = $region17
    $region16: #{tpu_custom_call.1} parent=1 // pred_region
      _
    $region17: #{tpu_custom_call.1} parent=1 // pred_fallthru
      _
    // Predicated region
    $region18: #{tpu_custom_call.1} parent=1 // pred_check
      _
    $region19: #{tpu_custom_call.1} parent=1 // pred_check_branch
      %54 = sbr.rel (0) target = $region21
    $region20: #{tpu_custom_call.1} parent=1 // pred_region
      %s56 = ssub.s32 2048, 2048
      %57 = vsyncadd [#allocation9], %s56
      %s58 = sshll.u32 [#allocation8], 4
      %s59 = int_to_ptr.vmem [resolvable:$true] %s58
      %64 = dma.hbm_to_vmem [thread:$0]  %s4, 2048, %s59, [#allocation9], 128, 128, 8
    $region21: #{tpu_custom_call.1} parent=1 // pred_fallthru
      _
    // Predicated region
    $region22: #{tpu_custom_call.1} parent=1 // pred_check
      _
    $region23: #{tpu_custom_call.1} parent=1 // pred_check_branch
      %66 = sbr.rel (0) target = $region25
    $region24: #{tpu_custom_call.1} parent=1 // pred_region
      _
    $region25: #{tpu_custom_call.1} parent=1 // pred_fallthru
      _
    // Predicated region
    $region26: #{tpu_custom_call.1} parent=1 // pred_check
      _
    $region27: #{tpu_custom_call.1} parent=1 // pred_check_branch
      %68 = sbr.rel (0) target = $region29
    $region28: #{tpu_custom_call.1} parent=1 // pred_region
      %69 = dma.done [#allocation3], 1024
    $region29: #{tpu_custom_call.1} parent=1 // pred_fallthru
      _
    // Predicated region
    $region30: #{tpu_custom_call.1} parent=1 // pred_check
      _
    $region31: #{tpu_custom_call.1} parent=1 // pred_check_branch
      %71 = sbr.rel (0) target = $region33
    $region32: #{tpu_custom_call.1} parent=1 // pred_region
      %72 = dma.done [#allocation6], 1024
    $region33: #{tpu_custom_call.1} parent=1 // pred_fallthru
      _
    // Predicated region
    $region34: #{tpu_custom_call.1} parent=1 // pred_check
      _
    $region35: #{tpu_custom_call.1} parent=1 // pred_check_branch
      %74 = sbr.rel (0) target = $region37
    $region36: #{tpu_custom_call.1} parent=1 // pred_region
      %75 = dma.done [#allocation6], 2048
    $region37: #{tpu_custom_call.1} parent=1 // pred_fallthru
      _
    // Predicated region
    $region38: #{tpu_custom_call.1} parent=1 // pred_check
      _
    $region39: #{tpu_custom_call.1} parent=1 // pred_check_branch
      %77 = sbr.rel (0) target = $region41
    $region40: #{tpu_custom_call.1} parent=1 // pred_region
      %78 = dma.done [#allocation9], 2048
    $region41: #{tpu_custom_call.1} parent=1 // pred_fallthru
      _
    %v79 = vld [vmem:[#allocation5] sm:$0xff]
    %v80 = vld [vmem:[#allocation5 + $0x8] sm:$0xff]
    %v81 = vld [vmem:[#allocation5 + $0x10] sm:$0xff]
    %v82 = vld [vmem:[#allocation5 + $0x18] sm:$0xff]
    %v83 = vld [vmem:[#allocation5 + $0x20] sm:$0xff]
    %v84 = vld [vmem:[#allocation5 + $0x28] sm:$0xff]
    %v85 = vld [vmem:[#allocation5 + $0x30] sm:$0xff]
    %v86 = vld [vmem:[#allocation5 + $0x38] sm:$0x3]
    %v87 = vld [vmem:[#allocation7] sm:$0xff]
    %v88 = vld [vmem:[#allocation7 + $0x8] sm:$0xff]
    %v89 = vld [vmem:[#allocation7 + $0x10] sm:$0xff]
    %v90 = vld [vmem:[#allocation7 + $0x18] sm:$0xff]
    %v91 = vld [vmem:[#allocation7 + $0x20] sm:$0xff]
    %v92 = vld [vmem:[#allocation7 + $0x28] sm:$0xff]
    %v93 = vld [vmem:[#allocation7 + $0x30] sm:$0xff]
    %v94 = vld [vmem:[#allocation7 + $0x38] sm:$0xff]
    %v95 = vld [vmem:[#allocation7 + $0x40] sm:$0xff]
    %v96 = vld [vmem:[#allocation7 + $0x48] sm:$0xff]
    %v97 = vld [vmem:[#allocation7 + $0x50] sm:$0xff]
    %v98 = vld [vmem:[#allocation7 + $0x58] sm:$0xff]
    %v99 = vld [vmem:[#allocation7 + $0x60] sm:$0xff]
    %v100 = vld [vmem:[#allocation7 + $0x68] sm:$0xff]
    %v101 = vld [vmem:[#allocation7 + $0x70] sm:$0xff]
    %v102 = vld [vmem:[#allocation7 + $0x78] sm:$0xff]
    %v103 = vld [vmem:[%s3] sm:$0x1]
    %v105 = vlaneseq
    %v106 = vshrl.u32 %v105, 7
    %v107 = vsub.s32 0, %v106
    %v108 = vrot.slane %v103, %v107
    %v110 = vld [vmem:[#allocation2] sm:$0xff]
    %111 = vmatprep.subr.mxu0 0.0
    %112 = vmatpush1.msra.mxu0 %v102
    %113 = vmatprep.subr.mxu0 0.0
    %114 = vmatpush1.msra.mxu0 %v101
    %115 = vmatprep.subr.mxu0 0.0
    %116 = vmatpush1.msra.mxu0 %v100
    %117 = vmatprep.subr.mxu0 0.0
    %118 = vmatpush1.msra.mxu0 %v99
    %119 = vmatprep.subr.mxu0 0.0
    %120 = vmatpush1.msra.mxu0 %v98
    %121 = vmatprep.subr.mxu0 0.0
    %122 = vmatpush1.msra.mxu0 %v97
    %123 = vmatprep.subr.mxu0 0.0
    %124 = vmatpush1.msra.mxu0 %v96
    %125 = vmatprep.subr.mxu0 0.0
    %126 = vmatpush1.msra.mxu0 %v95
    %127 = vmatprep.subr.mxu0 0.0
    %128 = vmatpush1.msra.mxu0 %v94
    %129 = vmatprep.subr.mxu0 0.0
    %130 = vmatpush1.msra.mxu0 %v93
    %131 = vmatprep.subr.mxu0 0.0
    %132 = vmatpush1.msra.mxu0 %v92
    %133 = vmatprep.subr.mxu0 0.0
    %134 = vmatpush1.msra.mxu0 %v91
    %135 = vmatprep.subr.mxu0 0.0
    %136 = vmatpush1.msra.mxu0 %v90
    %137 = vmatprep.subr.mxu0 0.0
    %138 = vmatpush1.msra.mxu0 %v89
    %139 = vmatprep.subr.mxu0 0.0
    %140 = vmatpush1.msra.mxu0 %v88
    %141 = vmatprep.subr.mxu0 0.0
    %142 = vmatpush1.msra.mxu0 %v87
    %143 = vmatprep.subr.mxu0 0.0
    %144 = vmatpush2.msra.mxu0 0.0
    %145 = vmatprep.subr.mxu0 0.0
    %146 = vmatpush2.msra.mxu0 0.0
    %147 = vmatprep.subr.mxu0 0.0
    %148 = vmatpush2.msra.mxu0 0.0
    %149 = vmatprep.subr.mxu0 0.0
    %150 = vmatpush2.msra.mxu0 0.0
    %151 = vmatprep.subr.mxu0 0.0
    %152 = vmatpush2.msra.mxu0 0.0
    %153 = vmatprep.subr.mxu0 0.0
    %154 = vmatpush2.msra.mxu0 0.0
    %155 = vmatprep.subr.mxu0 0.0
    %156 = vmatpush2.msra.mxu0 0.0
    %157 = vmatprep.subr.mxu0 0.0
    %158 = vmatpush2.msra.mxu0 0.0
    %159 = vmatprep.subr.mxu0 0.0
    %160 = vmatpush2.msra.mxu0 0.0
    %161 = vmatprep.subr.mxu0 0.0
    %162 = vmatpush2.msra.mxu0 0.0
    %163 = vmatprep.subr.mxu0 0.0
    %164 = vmatpush2.msra.mxu0 0.0
    %165 = vmatprep.subr.mxu0 0.0
    %166 = vmatpush2.msra.mxu0 0.0
    %167 = vmatprep.subr.mxu0 0.0
    %168 = vmatpush2.msra.mxu0 0.0
    %169 = vmatprep.subr.mxu0 0.0
    %170 = vmatpush2.msra.mxu0 0.0
    %171 = vmatprep.subr.mxu0 0.0
    %172 = vmatpush2.msra.mxu0 0.0
    %173 = vmatprep.subr.mxu0 0.0
    %174 = vmatpush2.msra.mxu0 0.0
    %175 = vmatprep.mubr.f32.mxu0 0.0
    %176 = vmatmul.mubr.f32.gmra.mxu0 0.0
    %v177 = vpop.f32.mrf.mxu0
    %v178 = vadd.f32 0.0, %v177
    %v179 = vpop.f32.mrf.mxu0
    %180 = vdwg.mxu0
    %vm181 = vcmask 474112
    %v183 = vsel %vm181, %v110, 0
    %vm185 = vcmask 1041408
    %v187 = vsel %vm185, %v86, 0
    %189 = vmatprep.subr.mxu0 0.0
    %190 = vmatpush1.msra.mxu0 0.0
    %191 = vmatprep.subr.mxu0 0.0
    %192 = vmatpush1.msra.mxu0 0.0
    %193 = vmatprep.subr.mxu0 0.0
    %194 = vmatpush1.msra.mxu0 0.0
    %195 = vmatprep.subr.mxu0 0.0
    %196 = vmatpush1.msra.mxu0 0.0
    %197 = vmatprep.subr.mxu0 0.0
    %198 = vmatpush1.msra.mxu0 0.0
    %199 = vmatprep.subr.mxu0 0.0
    %200 = vmatpush1.msra.mxu0 0.0
    %201 = vmatprep.subr.mxu0 0.0
    %202 = vmatpush1.msra.mxu0 0.0
    %203 = vmatprep.subr.mxu0 0.0
    %204 = vmatpush1.msra.mxu0 0.0
    %205 = vmatprep.subr.mxu0 0.0
    %206 = vmatpush1.msra.mxu0 %v187
    %207 = vmatprep.subr.mxu0 0.0
    %208 = vmatpush1.msra.mxu0 %v85
    %209 = vmatprep.subr.mxu0 0.0
    %210 = vmatpush1.msra.mxu0 %v84
    %211 = vmatprep.subr.mxu0 0.0
    %212 = vmatpush1.msra.mxu0 %v83
    %213 = vmatprep.subr.mxu0 0.0
    %214 = vmatpush1.msra.mxu0 %v82
    %215 = vmatprep.subr.mxu0 0.0
    %216 = vmatpush1.msra.mxu0 %v81
    %217 = vmatprep.subr.mxu0 0.0
    %218 = vmatpush1.msra.mxu0 %v80
    %219 = vmatprep.subr.mxu0 0.0
    %220 = vmatpush1.msra.mxu0 %v79
    %221 = vmatprep.subr.mxu0 0.0
    %222 = vmatpush2.msra.mxu0 0.0
    %223 = vmatprep.subr.mxu0 0.0
    %224 = vmatpush2.msra.mxu0 0.0
    %225 = vmatprep.subr.mxu0 0.0
    %226 = vmatpush2.msra.mxu0 0.0
    %227 = vmatprep.subr.mxu0 0.0
    %228 = vmatpush2.msra.mxu0 0.0
    %229 = vmatprep.subr.mxu0 0.0
    %230 = vmatpush2.msra.mxu0 0.0
    %231 = vmatprep.subr.mxu0 0.0
    %232 = vmatpush2.msra.mxu0 0.0
    %233 = vmatprep.subr.mxu0 0.0
    %234 = vmatpush2.msra.mxu0 0.0
    %235 = vmatprep.subr.mxu0 0.0
    %236 = vmatpush2.msra.mxu0 0.0
    %237 = vmatprep.subr.mxu0 0.0
    %238 = vmatpush2.msra.mxu0 0.0
    %239 = vmatprep.subr.mxu0 0.0
    %240 = vmatpush2.msra.mxu0 0.0
    %241 = vmatprep.subr.mxu0 0.0
    %242 = vmatpush2.msra.mxu0 0.0
    %243 = vmatprep.subr.mxu0 0.0
    %244 = vmatpush2.msra.mxu0 0.0
    %245 = vmatprep.subr.mxu0 0.0
    %246 = vmatpush2.msra.mxu0 0.0
    %247 = vmatprep.subr.mxu0 0.0
    %248 = vmatpush2.msra.mxu0 0.0
    %249 = vmatprep.subr.mxu0 0.0
    %250 = vmatpush2.msra.mxu0 0.0
    %251 = vmatprep.subr.mxu0 0.0
    %252 = vmatpush2.msra.mxu0 0.0
    %253 = vmatprep.mubr.f32.mxu0 0.0
    %254 = vmatmul.mubr.f32.gmra.mxu0 %v183
    %v255 = vpop.f32.mrf.mxu0
    %v256 = vadd.f32 %v178, %v255
    %v257 = vpop.f32.mrf.mxu0
    %258 = vdwg.mxu0
    %v259 = vadd.f32 %v256, %v108
    %v260 = vtanh.pop %v259
    %s261 = scalar_lea.vmem [#allocation2], 8
    %v262 = vld [vmem:[%s261] sm:$0xff]
    %263 = vmatprep.subr.mxu0 0.0
    %264 = vmatpush1.msra.mxu0 %v102
    %265 = vmatprep.subr.mxu0 0.0
    %266 = vmatpush1.msra.mxu0 %v101
    %267 = vmatprep.subr.mxu0 0.0
    %268 = vmatpush1.msra.mxu0 %v100
    %269 = vmatprep.subr.mxu0 0.0
    %270 = vmatpush1.msra.mxu0 %v99
    %271 = vmatprep.subr.mxu0 0.0
    %272 = vmatpush1.msra.mxu0 %v98
    %273 = vmatprep.subr.mxu0 0.0
    %274 = vmatpush1.msra.mxu0 %v97
    %275 = vmatprep.subr.mxu0 0.0
    %276 = vmatpush1.msra.mxu0 %v96
    %277 = vmatprep.subr.mxu0 0.0
    %278 = vmatpush1.msra.mxu0 %v95
    %279 = vmatprep.subr.mxu0 0.0
    %280 = vmatpush1.msra.mxu0 %v94
    %281 = vmatprep.subr.mxu0 0.0
    %282 = vmatpush1.msra.mxu0 %v93
    %283 = vmatprep.subr.mxu0 0.0
    %284 = vmatpush1.msra.mxu0 %v92
    %285 = vmatprep.subr.mxu0 0.0
    %286 = vmatpush1.msra.mxu0 %v91
    %287 = vmatprep.subr.mxu0 0.0
    %288 = vmatpush1.msra.mxu0 %v90
    %289 = vmatprep.subr.mxu0 0.0
    %290 = vmatpush1.msra.mxu0 %v89
    %291 = vmatprep.subr.mxu0 0.0
    %292 = vmatpush1.msra.mxu0 %v88
    %293 = vmatprep.subr.mxu0 0.0
    %294 = vmatpush1.msra.mxu0 %v87
    %295 = vmatprep.subr.mxu0 0.0
    %296 = vmatpush2.msra.mxu0 0.0
    %297 = vmatprep.subr.mxu0 0.0
    %298 = vmatpush2.msra.mxu0 0.0
    %299 = vmatprep.subr.mxu0 0.0
    %300 = vmatpush2.msra.mxu0 0.0
    %301 = vmatprep.subr.mxu0 0.0
    %302 = vmatpush2.msra.mxu0 0.0
    %303 = vmatprep.subr.mxu0 0.0
    %304 = vmatpush2.msra.mxu0 0.0
    %305 = vmatprep.subr.mxu0 0.0
    %306 = vmatpush2.msra.mxu0 0.0
    %307 = vmatprep.subr.mxu0 0.0
    %308 = vmatpush2.msra.mxu0 0.0
    %309 = vmatprep.subr.mxu0 0.0
    %310 = vmatpush2.msra.mxu0 0.0
    %311 = vmatprep.subr.mxu0 0.0
    %312 = vmatpush2.msra.mxu0 0.0
    %313 = vmatprep.subr.mxu0 0.0
    %314 = vmatpush2.msra.mxu0 0.0
    %315 = vmatprep.subr.mxu0 0.0
    %316 = vmatpush2.msra.mxu0 0.0
    %317 = vmatprep.subr.mxu0 0.0
    %318 = vmatpush2.msra.mxu0 0.0
    %319 = vmatprep.subr.mxu0 0.0
    %320 = vmatpush2.msra.mxu0 0.0
    %321 = vmatprep.subr.mxu0 0.0
    %322 = vmatpush2.msra.mxu0 0.0
    %323 = vmatprep.subr.mxu0 0.0
    %324 = vmatpush2.msra.mxu0 0.0
    %325 = vmatprep.subr.mxu0 0.0
    %326 = vmatpush2.msra.mxu0 0.0
    %327 = vmatprep.mubr.f32.mxu0 0.0
    %328 = vmatmul.mubr.f32.gmra.mxu0 %v260
    %v329 = vpop.f32.mrf.mxu0
    %v330 = vadd.f32 0.0, %v329
    %v331 = vpop.f32.mrf.mxu0
    %332 = vdwg.mxu0
    %v334 = vsel %vm181, %v262, 0
    %336 = vmatprep.subr.mxu0 0.0
    %337 = vmatpush1.msra.mxu0 0.0
    %338 = vmatprep.subr.mxu0 0.0
    %339 = vmatpush1.msra.mxu0 0.0
    %340 = vmatprep.subr.mxu0 0.0
    %341 = vmatpush1.msra.mxu0 0.0
    %342 = vmatprep.subr.mxu0 0.0
    %343 = vmatpush1.msra.mxu0 0.0
    %344 = vmatprep.subr.mxu0 0.0
    %345 = vmatpush1.msra.mxu0 0.0
    %346 = vmatprep.subr.mxu0 0.0
    %347 = vmatpush1.msra.mxu0 0.0
    %348 = vmatprep.subr.mxu0 0.0
    %349 = vmatpush1.msra.mxu0 0.0
    %350 = vmatprep.subr.mxu0 0.0
    %351 = vmatpush1.msra.mxu0 0.0
    %352 = vmatprep.subr.mxu0 0.0
    %353 = vmatpush1.msra.mxu0 %v187
    %354 = vmatprep.subr.mxu0 0.0
    %355 = vmatpush1.msra.mxu0 %v85
    %356 = vmatprep.subr.mxu0 0.0
    %357 = vmatpush1.msra.mxu0 %v84
    %358 = vmatprep.subr.mxu0 0.0
    %359 = vmatpush1.msra.mxu0 %v83
    %360 = vmatprep.subr.mxu0 0.0
    %361 = vmatpush1.msra.mxu0 %v82
    %362 = vmatprep.subr.mxu0 0.0
    %363 = vmatpush1.msra.mxu0 %v81
    %364 = vmatprep.subr.mxu0 0.0
    %365 = vmatpush1.msra.mxu0 %v80
    %366 = vmatprep.subr.mxu0 0.0
    %367 = vmatpush1.msra.mxu0 %v79
    %368 = vmatprep.subr.mxu0 0.0
    %369 = vmatpush2.msra.mxu0 0.0
    %370 = vmatprep.subr.mxu0 0.0
    %371 = vmatpush2.msra.mxu0 0.0
    %372 = vmatprep.subr.mxu0 0.0
    %373 = vmatpush2.msra.mxu0 0.0
    %374 = vmatprep.subr.mxu0 0.0
    %375 = vmatpush2.msra.mxu0 0.0
    %376 = vmatprep.subr.mxu0 0.0
    %377 = vmatpush2.msra.mxu0 0.0
    %378 = vmatprep.subr.mxu0 0.0
    %379 = vmatpush2.msra.mxu0 0.0
    %380 = vmatprep.subr.mxu0 0.0
    %381 = vmatpush2.msra.mxu0 0.0
    %382 = vmatprep.subr.mxu0 0.0
    %383 = vmatpush2.msra.mxu0 0.0
    %384 = vmatprep.subr.mxu0 0.0
    %385 = vmatpush2.msra.mxu0 0.0
    %386 = vmatprep.subr.mxu0 0.0
    %387 = vmatpush2.msra.mxu0 0.0
    %388 = vmatprep.subr.mxu0 0.0
    %389 = vmatpush2.msra.mxu0 0.0
    %390 = vmatprep.subr.mxu0 0.0
    %391 = vmatpush2.msra.mxu0 0.0
    %392 = vmatprep.subr.mxu0 0.0
    %393 = vmatpush2.msra.mxu0 0.0
    %394 = vmatprep.subr.mxu0 0.0
    %395 = vmatpush2.msra.mxu0 0.0
    %396 = vmatprep.subr.mxu0 0.0
    %397 = vmatpush2.msra.mxu0 0.0
    %398 = vmatprep.subr.mxu0 0.0
    %399 = vmatpush2.msra.mxu0 0.0
    %400 = vmatprep.mubr.f32.mxu0 0.0
    %401 = vmatmul.mubr.f32.gmra.mxu0 %v334
    %v402 = vpop.f32.mrf.mxu0
    %v403 = vadd.f32 %v330, %v402
    %v404 = vpop.f32.mrf.mxu0
    %405 = vdwg.mxu0
    %v406 = vadd.f32 %v403, %v108
    %v407 = vtanh.pop %v406
    %s408 = scalar_lea.vmem [#allocation2], 16
    %v409 = vld [vmem:[%s408] sm:$0xff]
    %410 = vmatprep.subr.mxu0 0.0
    %411 = vmatpush1.msra.mxu0 %v102
    %412 = vmatprep.subr.mxu0 0.0
    %413 = vmatpush1.msra.mxu0 %v101
    %414 = vmatprep.subr.mxu0 0.0
    %415 = vmatpush1.msra.mxu0 %v100
    %416 = vmatprep.subr.mxu0 0.0
    %417 = vmatpush1.msra.mxu0 %v99
    %418 = vmatprep.subr.mxu0 0.0
    %419 = vmatpush1.msra.mxu0 %v98
    %420 = vmatprep.subr.mxu0 0.0
    %421 = vmatpush1.msra.mxu0 %v97
    %422 = vmatprep.subr.mxu0 0.0
    %423 = vmatpush1.msra.mxu0 %v96
    %424 = vmatprep.subr.mxu0 0.0
    %425 = vmatpush1.msra.mxu0 %v95
    %426 = vmatprep.subr.mxu0 0.0
    %427 = vmatpush1.msra.mxu0 %v94
    %428 = vmatprep.subr.mxu0 0.0
    %429 = vmatpush1.msra.mxu0 %v93
    %430 = vmatprep.subr.mxu0 0.0
    %431 = vmatpush1.msra.mxu0 %v92
    %432 = vmatprep.subr.mxu0 0.0
    %433 = vmatpush1.msra.mxu0 %v91
    %434 = vmatprep.subr.mxu0 0.0
    %435 = vmatpush1.msra.mxu0 %v90
    %436 = vmatprep.subr.mxu0 0.0
    %437 = vmatpush1.msra.mxu0 %v89
    %438 = vmatprep.subr.mxu0 0.0
    %439 = vmatpush1.msra.mxu0 %v88
    %440 = vmatprep.subr.mxu0 0.0
    %441 = vmatpush1.msra.mxu0 %v87
    %442 = vmatprep.subr.mxu0 0.0
    %443 = vmatpush2.msra.mxu0 0.0
    %444 = vmatprep.subr.mxu0 0.0
    %445 = vmatpush2.msra.mxu0 0.0
    %446 = vmatprep.subr.mxu0 0.0
    %447 = vmatpush2.msra.mxu0 0.0
    %448 = vmatprep.subr.mxu0 0.0
    %449 = vmatpush2.msra.mxu0 0.0
    %450 = vmatprep.subr.mxu0 0.0
    %451 = vmatpush2.msra.mxu0 0.0
    %452 = vmatprep.subr.mxu0 0.0
    %453 = vmatpush2.msra.mxu0 0.0
    %454 = vmatprep.subr.mxu0 0.0
    %455 = vmatpush2.msra.mxu0 0.0
    %456 = vmatprep.subr.mxu0 0.0
    %457 = vmatpush2.msra.mxu0 0.0
    %458 = vmatprep.subr.mxu0 0.0
    %459 = vmatpush2.msra.mxu0 0.0
    %460 = vmatprep.subr.mxu0 0.0
    %461 = vmatpush2.msra.mxu0 0.0
    %462 = vmatprep.subr.mxu0 0.0
    %463 = vmatpush2.msra.mxu0 0.0
    %464 = vmatprep.subr.mxu0 0.0
    %465 = vmatpush2.msra.mxu0 0.0
    %466 = vmatprep.subr.mxu0 0.0
    %467 = vmatpush2.msra.mxu0 0.0
    %468 = vmatprep.subr.mxu0 0.0
    %469 = vmatpush2.msra.mxu0 0.0
    %470 = vmatprep.subr.mxu0 0.0
    %471 = vmatpush2.msra.mxu0 0.0
    %472 = vmatprep.subr.mxu0 0.0
    %473 = vmatpush2.msra.mxu0 0.0
    %474 = vmatprep.mubr.f32.mxu0 0.0
    %475 = vmatmul.mubr.f32.gmra.mxu0 %v407
    %v476 = vpop.f32.mrf.mxu0
    %v477 = vadd.f32 0.0, %v476
    %v478 = vpop.f32.mrf.mxu0
    %479 = vdwg.mxu0
    %v481 = vsel %vm181, %v409, 0
    %483 = vmatprep.subr.mxu0 0.0
    %484 = vmatpush1.msra.mxu0 0.0
    %485 = vmatprep.subr.mxu0 0.0
    %486 = vmatpush1.msra.mxu0 0.0
    %487 = vmatprep.subr.mxu0 0.0
    %488 = vmatpush1.msra.mxu0 0.0
    %489 = vmatprep.subr.mxu0 0.0
    %490 = vmatpush1.msra.mxu0 0.0
    %491 = vmatprep.subr.mxu0 0.0
    %492 = vmatpush1.msra.mxu0 0.0
    %493 = vmatprep.subr.mxu0 0.0
    %494 = vmatpush1.msra.mxu0 0.0
    %495 = vmatprep.subr.mxu0 0.0
    %496 = vmatpush1.msra.mxu0 0.0
    %497 = vmatprep.subr.mxu0 0.0
    %498 = vmatpush1.msra.mxu0 0.0
    %499 = vmatprep.subr.mxu0 0.0
    %500 = vmatpush1.msra.mxu0 %v187
    %501 = vmatprep.subr.mxu0 0.0
    %502 = vmatpush1.msra.mxu0 %v85
    %503 = vmatprep.subr.mxu0 0.0
    %504 = vmatpush1.msra.mxu0 %v84
    %505 = vmatprep.subr.mxu0 0.0
    %506 = vmatpush1.msra.mxu0 %v83
    %507 = vmatprep.subr.mxu0 0.0
    %508 = vmatpush1.msra.mxu0 %v82
    %509 = vmatprep.subr.mxu0 0.0
    %510 = vmatpush1.msra.mxu0 %v81
    %511 = vmatprep.subr.mxu0 0.0
    %512 = vmatpush1.msra.mxu0 %v80
    %513 = vmatprep.subr.mxu0 0.0
    %514 = vmatpush1.msra.mxu0 %v79
    %515 = vmatprep.subr.mxu0 0.0
    %516 = vmatpush2.msra.mxu0 0.0
    %517 = vmatprep.subr.mxu0 0.0
    %518 = vmatpush2.msra.mxu0 0.0
    %519 = vmatprep.subr.mxu0 0.0
    %520 = vmatpush2.msra.mxu0 0.0
    %521 = vmatprep.subr.mxu0 0.0
    %522 = vmatpush2.msra.mxu0 0.0
    %523 = vmatprep.subr.mxu0 0.0
    %524 = vmatpush2.msra.mxu0 0.0
    %525 = vmatprep.subr.mxu0 0.0
    %526 = vmatpush2.msra.mxu0 0.0
    %527 = vmatprep.subr.mxu0 0.0
    %528 = vmatpush2.msra.mxu0 0.0
    %529 = vmatprep.subr.mxu0 0.0
    %530 = vmatpush2.msra.mxu0 0.0
    %531 = vmatprep.subr.mxu0 0.0
    %532 = vmatpush2.msra.mxu0 0.0
    %533 = vmatprep.subr.mxu0 0.0
    %534 = vmatpush2.msra.mxu0 0.0
    %535 = vmatprep.subr.mxu0 0.0
    %536 = vmatpush2.msra.mxu0 0.0
    %537 = vmatprep.subr.mxu0 0.0
    %538 = vmatpush2.msra.mxu0 0.0
    %539 = vmatprep.subr.mxu0 0.0
    %540 = vmatpush2.msra.mxu0 0.0
    %541 = vmatprep.subr.mxu0 0.0
    %542 = vmatpush2.msra.mxu0 0.0
    %543 = vmatprep.subr.mxu0 0.0
    %544 = vmatpush2.msra.mxu0 0.0
    %545 = vmatprep.subr.mxu0 0.0
    %546 = vmatpush2.msra.mxu0 0.0
    %547 = vmatprep.mubr.f32.mxu0 0.0
    %548 = vmatmul.mubr.f32.gmra.mxu0 %v481
    %v549 = vpop.f32.mrf.mxu0
    %v550 = vadd.f32 %v477, %v549
    %v551 = vpop.f32.mrf.mxu0
    %552 = vdwg.mxu0
    %v553 = vadd.f32 %v550, %v108
    %v554 = vtanh.pop %v553
    %s555 = scalar_lea.vmem [#allocation2], 24
    %v556 = vld [vmem:[%s555] sm:$0xff]
    %557 = vmatprep.subr.mxu0 0.0
    %558 = vmatpush1.msra.mxu0 %v102
    %559 = vmatprep.subr.mxu0 0.0
    %560 = vmatpush1.msra.mxu0 %v101
    %561 = vmatprep.subr.mxu0 0.0
    %562 = vmatpush1.msra.mxu0 %v100
    %563 = vmatprep.subr.mxu0 0.0
    %564 = vmatpush1.msra.mxu0 %v99
    %565 = vmatprep.subr.mxu0 0.0
    %566 = vmatpush1.msra.mxu0 %v98
    %567 = vmatprep.subr.mxu0 0.0
    %568 = vmatpush1.msra.mxu0 %v97
    %569 = vmatprep.subr.mxu0 0.0
    %570 = vmatpush1.msra.mxu0 %v96
    %571 = vmatprep.subr.mxu0 0.0
    %572 = vmatpush1.msra.mxu0 %v95
    %573 = vmatprep.subr.mxu0 0.0
    %574 = vmatpush1.msra.mxu0 %v94
    %575 = vmatprep.subr.mxu0 0.0
    %576 = vmatpush1.msra.mxu0 %v93
    %577 = vmatprep.subr.mxu0 0.0
    %578 = vmatpush1.msra.mxu0 %v92
    %579 = vmatprep.subr.mxu0 0.0
    %580 = vmatpush1.msra.mxu0 %v91
    %581 = vmatprep.subr.mxu0 0.0
    %582 = vmatpush1.msra.mxu0 %v90
    %583 = vmatprep.subr.mxu0 0.0
    %584 = vmatpush1.msra.mxu0 %v89
    %585 = vmatprep.subr.mxu0 0.0
    %586 = vmatpush1.msra.mxu0 %v88
    %587 = vmatprep.subr.mxu0 0.0
    %588 = vmatpush1.msra.mxu0 %v87
    %589 = vmatprep.subr.mxu0 0.0
    %590 = vmatpush2.msra.mxu0 0.0
    %591 = vmatprep.subr.mxu0 0.0
    %592 = vmatpush2.msra.mxu0 0.0
    %593 = vmatprep.subr.mxu0 0.0
    %594 = vmatpush2.msra.mxu0 0.0
    %595 = vmatprep.subr.mxu0 0.0
    %596 = vmatpush2.msra.mxu0 0.0
    %597 = vmatprep.subr.mxu0 0.0
    %598 = vmatpush2.msra.mxu0 0.0
    %599 = vmatprep.subr.mxu0 0.0
    %600 = vmatpush2.msra.mxu0 0.0
    %601 = vmatprep.subr.mxu0 0.0
    %602 = vmatpush2.msra.mxu0 0.0
    %603 = vmatprep.subr.mxu0 0.0
    %604 = vmatpush2.msra.mxu0 0.0
    %605 = vmatprep.subr.mxu0 0.0
    %606 = vmatpush2.msra.mxu0 0.0
    %607 = vmatprep.subr.mxu0 0.0
    %608 = vmatpush2.msra.mxu0 0.0
    %609 = vmatprep.subr.mxu0 0.0
    %610 = vmatpush2.msra.mxu0 0.0
    %611 = vmatprep.subr.mxu0 0.0
    %612 = vmatpush2.msra.mxu0 0.0
    %613 = vmatprep.subr.mxu0 0.0
    %614 = vmatpush2.msra.mxu0 0.0
    %615 = vmatprep.subr.mxu0 0.0
    %616 = vmatpush2.msra.mxu0 0.0
    %617 = vmatprep.subr.mxu0 0.0
    %618 = vmatpush2.msra.mxu0 0.0
    %619 = vmatprep.subr.mxu0 0.0
    %620 = vmatpush2.msra.mxu0 0.0
    %621 = vmatprep.mubr.f32.mxu0 0.0
    %622 = vmatmul.mubr.f32.gmra.mxu0 %v554
    %v623 = vpop.f32.mrf.mxu0
    %v624 = vadd.f32 0.0, %v623
    %v625 = vpop.f32.mrf.mxu0
    %626 = vdwg.mxu0
    %v628 = vsel %vm181, %v556, 0
    %630 = vmatprep.subr.mxu0 0.0
    %631 = vmatpush1.msra.mxu0 0.0
    %632 = vmatprep.subr.mxu0 0.0
    %633 = vmatpush1.msra.mxu0 0.0
    %634 = vmatprep.subr.mxu0 0.0
    %635 = vmatpush1.msra.mxu0 0.0
    %636 = vmatprep.subr.mxu0 0.0
    %637 = vmatpush1.msra.mxu0 0.0
    %638 = vmatprep.subr.mxu0 0.0
    %639 = vmatpush1.msra.mxu0 0.0
    %640 = vmatprep.subr.mxu0 0.0
    %641 = vmatpush1.msra.mxu0 0.0
    %642 = vmatprep.subr.mxu0 0.0
    %643 = vmatpush1.msra.mxu0 0.0
    %644 = vmatprep.subr.mxu0 0.0
    %645 = vmatpush1.msra.mxu0 0.0
    %646 = vmatprep.subr.mxu0 0.0
    %647 = vmatpush1.msra.mxu0 %v187
    %648 = vmatprep.subr.mxu0 0.0
    %649 = vmatpush1.msra.mxu0 %v85
    %650 = vmatprep.subr.mxu0 0.0
    %651 = vmatpush1.msra.mxu0 %v84
    %652 = vmatprep.subr.mxu0 0.0
    %653 = vmatpush1.msra.mxu0 %v83
    %654 = vmatprep.subr.mxu0 0.0
    %655 = vmatpush1.msra.mxu0 %v82
    %656 = vmatprep.subr.mxu0 0.0
    %657 = vmatpush1.msra.mxu0 %v81
    %658 = vmatprep.subr.mxu0 0.0
    %659 = vmatpush1.msra.mxu0 %v80
    %660 = vmatprep.subr.mxu0 0.0
    %661 = vmatpush1.msra.mxu0 %v79
    %662 = vmatprep.subr.mxu0 0.0
    %663 = vmatpush2.msra.mxu0 0.0
    %664 = vmatprep.subr.mxu0 0.0
    %665 = vmatpush2.msra.mxu0 0.0
    %666 = vmatprep.subr.mxu0 0.0
    %667 = vmatpush2.msra.mxu0 0.0
    %668 = vmatprep.subr.mxu0 0.0
    %669 = vmatpush2.msra.mxu0 0.0
    %670 = vmatprep.subr.mxu0 0.0
    %671 = vmatpush2.msra.mxu0 0.0
    %672 = vmatprep.subr.mxu0 0.0
    %673 = vmatpush2.msra.mxu0 0.0
    %674 = vmatprep.subr.mxu0 0.0
    %675 = vmatpush2.msra.mxu0 0.0
    %676 = vmatprep.subr.mxu0 0.0
    %677 = vmatpush2.msra.mxu0 0.0
    %678 = vmatprep.subr.mxu0 0.0
    %679 = vmatpush2.msra.mxu0 0.0
    %680 = vmatprep.subr.mxu0 0.0
    %681 = vmatpush2.msra.mxu0 0.0
    %682 = vmatprep.subr.mxu0 0.0
    %683 = vmatpush2.msra.mxu0 0.0
    %684 = vmatprep.subr.mxu0 0.0
    %685 = vmatpush2.msra.mxu0 0.0
    %686 = vmatprep.subr.mxu0 0.0
    %687 = vmatpush2.msra.mxu0 0.0
    %688 = vmatprep.subr.mxu0 0.0
    %689 = vmatpush2.msra.mxu0 0.0
    %690 = vmatprep.subr.mxu0 0.0
    %691 = vmatpush2.msra.mxu0 0.0
    %692 = vmatprep.subr.mxu0 0.0
    %693 = vmatpush2.msra.mxu0 0.0
    %694 = vmatprep.mubr.f32.mxu0 0.0
    %695 = vmatmul.mubr.f32.gmra.mxu0 %v628
    %v696 = vpop.f32.mrf.mxu0
    %v697 = vadd.f32 %v624, %v696
    %v698 = vpop.f32.mrf.mxu0
    %699 = vdwg.mxu0
    %v700 = vadd.f32 %v697, %v108
    %v701 = vtanh.pop %v700
    %s702 = scalar_lea.vmem [#allocation2], 32
    %v703 = vld [vmem:[%s702] sm:$0xff]
    %704 = vmatprep.subr.mxu0 0.0
    %705 = vmatpush1.msra.mxu0 %v102
    %706 = vmatprep.subr.mxu0 0.0
    %707 = vmatpush1.msra.mxu0 %v101
    %708 = vmatprep.subr.mxu0 0.0
    %709 = vmatpush1.msra.mxu0 %v100
    %710 = vmatprep.subr.mxu0 0.0
    %711 = vmatpush1.msra.mxu0 %v99
    %712 = vmatprep.subr.mxu0 0.0
    %713 = vmatpush1.msra.mxu0 %v98
    %714 = vmatprep.subr.mxu0 0.0
    %715 = vmatpush1.msra.mxu0 %v97
    %716 = vmatprep.subr.mxu0 0.0
    %717 = vmatpush1.msra.mxu0 %v96
    %718 = vmatprep.subr.mxu0 0.0
    %719 = vmatpush1.msra.mxu0 %v95
    %720 = vmatprep.subr.mxu0 0.0
    %721 = vmatpush1.msra.mxu0 %v94
    %722 = vmatprep.subr.mxu0 0.0
    %723 = vmatpush1.msra.mxu0 %v93
    %724 = vmatprep.subr.mxu0 0.0
    %725 = vmatpush1.msra.mxu0 %v92
    %726 = vmatprep.subr.mxu0 0.0
    %727 = vmatpush1.msra.mxu0 %v91
    %728 = vmatprep.subr.mxu0 0.0
    %729 = vmatpush1.msra.mxu0 %v90
    %730 = vmatprep.subr.mxu0 0.0
    %731 = vmatpush1.msra.mxu0 %v89
    %732 = vmatprep.subr.mxu0 0.0
    %733 = vmatpush1.msra.mxu0 %v88
    %734 = vmatprep.subr.mxu0 0.0
    %735 = vmatpush1.msra.mxu0 %v87
    %736 = vmatprep.subr.mxu0 0.0
    %737 = vmatpush2.msra.mxu0 0.0
    %738 = vmatprep.subr.mxu0 0.0
    %739 = vmatpush2.msra.mxu0 0.0
    %740 = vmatprep.subr.mxu0 0.0
    %741 = vmatpush2.msra.mxu0 0.0
    %742 = vmatprep.subr.mxu0 0.0
    %743 = vmatpush2.msra.mxu0 0.0
    %744 = vmatprep.subr.mxu0 0.0
    %745 = vmatpush2.msra.mxu0 0.0
    %746 = vmatprep.subr.mxu0 0.0
    %747 = vmatpush2.msra.mxu0 0.0
    %748 = vmatprep.subr.mxu0 0.0
    %749 = vmatpush2.msra.mxu0 0.0
    %750 = vmatprep.subr.mxu0 0.0
    %751 = vmatpush2.msra.mxu0 0.0
    %752 = vmatprep.subr.mxu0 0.0
    %753 = vmatpush2.msra.mxu0 0.0
    %754 = vmatprep.subr.mxu0 0.0
    %755 = vmatpush2.msra.mxu0 0.0
    %756 = vmatprep.subr.mxu0 0.0
    %757 = vmatpush2.msra.mxu0 0.0
    %758 = vmatprep.subr.mxu0 0.0
    %759 = vmatpush2.msra.mxu0 0.0
    %760 = vmatprep.subr.mxu0 0.0
    %761 = vmatpush2.msra.mxu0 0.0
    %762 = vmatprep.subr.mxu0 0.0
    %763 = vmatpush2.msra.mxu0 0.0
    %764 = vmatprep.subr.mxu0 0.0
    %765 = vmatpush2.msra.mxu0 0.0
    %766 = vmatprep.subr.mxu0 0.0
    %767 = vmatpush2.msra.mxu0 0.0
    %768 = vmatprep.mubr.f32.mxu0 0.0
    %769 = vmatmul.mubr.f32.gmra.mxu0 %v701
    %v770 = vpop.f32.mrf.mxu0
    %v771 = vadd.f32 0.0, %v770
    %v772 = vpop.f32.mrf.mxu0
    %773 = vdwg.mxu0
    %v775 = vsel %vm181, %v703, 0
    %777 = vmatprep.subr.mxu0 0.0
    %778 = vmatpush1.msra.mxu0 0.0
    %779 = vmatprep.subr.mxu0 0.0
    %780 = vmatpush1.msra.mxu0 0.0
    %781 = vmatprep.subr.mxu0 0.0
    %782 = vmatpush1.msra.mxu0 0.0
    %783 = vmatprep.subr.mxu0 0.0
    %784 = vmatpush1.msra.mxu0 0.0
    %785 = vmatprep.subr.mxu0 0.0
    %786 = vmatpush1.msra.mxu0 0.0
    %787 = vmatprep.subr.mxu0 0.0
    %788 = vmatpush1.msra.mxu0 0.0
    %789 = vmatprep.subr.mxu0 0.0
    %790 = vmatpush1.msra.mxu0 0.0
    %791 = vmatprep.subr.mxu0 0.0
    %792 = vmatpush1.msra.mxu0 0.0
    %793 = vmatprep.subr.mxu0 0.0
    %794 = vmatpush1.msra.mxu0 %v187
    %795 = vmatprep.subr.mxu0 0.0
    %796 = vmatpush1.msra.mxu0 %v85
    %797 = vmatprep.subr.mxu0 0.0
    %798 = vmatpush1.msra.mxu0 %v84
    %799 = vmatprep.subr.mxu0 0.0
    %800 = vmatpush1.msra.mxu0 %v83
    %801 = vmatprep.subr.mxu0 0.0
    %802 = vmatpush1.msra.mxu0 %v82
    %803 = vmatprep.subr.mxu0 0.0
    %804 = vmatpush1.msra.mxu0 %v81
    %805 = vmatprep.subr.mxu0 0.0
    %806 = vmatpush1.msra.mxu0 %v80
    %807 = vmatprep.subr.mxu0 0.0
    %808 = vmatpush1.msra.mxu0 %v79
    %809 = vmatprep.subr.mxu0 0.0
    %810 = vmatpush2.msra.mxu0 0.0
    %811 = vmatprep.subr.mxu0 0.0
    %812 = vmatpush2.msra.mxu0 0.0
    %813 = vmatprep.subr.mxu0 0.0
    %814 = vmatpush2.msra.mxu0 0.0
    %815 = vmatprep.subr.mxu0 0.0
    %816 = vmatpush2.msra.mxu0 0.0
    %817 = vmatprep.subr.mxu0 0.0
    %818 = vmatpush2.msra.mxu0 0.0
    %819 = vmatprep.subr.mxu0 0.0
    %820 = vmatpush2.msra.mxu0 0.0
    %821 = vmatprep.subr.mxu0 0.0
    %822 = vmatpush2.msra.mxu0 0.0
    %823 = vmatprep.subr.mxu0 0.0
    %824 = vmatpush2.msra.mxu0 0.0
    %825 = vmatprep.subr.mxu0 0.0
    %826 = vmatpush2.msra.mxu0 0.0
    %827 = vmatprep.subr.mxu0 0.0
    %828 = vmatpush2.msra.mxu0 0.0
    %829 = vmatprep.subr.mxu0 0.0
    %830 = vmatpush2.msra.mxu0 0.0
    %831 = vmatprep.subr.mxu0 0.0
    %832 = vmatpush2.msra.mxu0 0.0
    %833 = vmatprep.subr.mxu0 0.0
    %834 = vmatpush2.msra.mxu0 0.0
    %835 = vmatprep.subr.mxu0 0.0
    %836 = vmatpush2.msra.mxu0 0.0
    %837 = vmatprep.subr.mxu0 0.0
    %838 = vmatpush2.msra.mxu0 0.0
    %839 = vmatprep.subr.mxu0 0.0
    %840 = vmatpush2.msra.mxu0 0.0
    %841 = vmatprep.mubr.f32.mxu0 0.0
    %842 = vmatmul.mubr.f32.gmra.mxu0 %v775
    %v843 = vpop.f32.mrf.mxu0
    %v844 = vadd.f32 %v771, %v843
    %v845 = vpop.f32.mrf.mxu0
    %846 = vdwg.mxu0
    %v847 = vadd.f32 %v844, %v108
    %v848 = vtanh.pop %v847
    %s849 = scalar_lea.vmem [#allocation2], 40
    %v850 = vld [vmem:[%s849] sm:$0xff]
    %851 = vmatprep.subr.mxu0 0.0
    %852 = vmatpush1.msra.mxu0 %v102
    %853 = vmatprep.subr.mxu0 0.0
    %854 = vmatpush1.msra.mxu0 %v101
    %855 = vmatprep.subr.mxu0 0.0
    %856 = vmatpush1.msra.mxu0 %v100
    %857 = vmatprep.subr.mxu0 0.0
    %858 = vmatpush1.msra.mxu0 %v99
    %859 = vmatprep.subr.mxu0 0.0
    %860 = vmatpush1.msra.mxu0 %v98
    %861 = vmatprep.subr.mxu0 0.0
    %862 = vmatpush1.msra.mxu0 %v97
    %863 = vmatprep.subr.mxu0 0.0
    %864 = vmatpush1.msra.mxu0 %v96
    %865 = vmatprep.subr.mxu0 0.0
    %866 = vmatpush1.msra.mxu0 %v95
    %867 = vmatprep.subr.mxu0 0.0
    %868 = vmatpush1.msra.mxu0 %v94
    %869 = vmatprep.subr.mxu0 0.0
    %870 = vmatpush1.msra.mxu0 %v93
    %871 = vmatprep.subr.mxu0 0.0
    %872 = vmatpush1.msra.mxu0 %v92
    %873 = vmatprep.subr.mxu0 0.0
    %874 = vmatpush1.msra.mxu0 %v91
    %875 = vmatprep.subr.mxu0 0.0
    %876 = vmatpush1.msra.mxu0 %v90
    %877 = vmatprep.subr.mxu0 0.0
    %878 = vmatpush1.msra.mxu0 %v89
    %879 = vmatprep.subr.mxu0 0.0
    %880 = vmatpush1.msra.mxu0 %v88
    %881 = vmatprep.subr.mxu0 0.0
    %882 = vmatpush1.msra.mxu0 %v87
    %883 = vmatprep.subr.mxu0 0.0
    %884 = vmatpush2.msra.mxu0 0.0
    %885 = vmatprep.subr.mxu0 0.0
    %886 = vmatpush2.msra.mxu0 0.0
    %887 = vmatprep.subr.mxu0 0.0
    %888 = vmatpush2.msra.mxu0 0.0
    %889 = vmatprep.subr.mxu0 0.0
    %890 = vmatpush2.msra.mxu0 0.0
    %891 = vmatprep.subr.mxu0 0.0
    %892 = vmatpush2.msra.mxu0 0.0
    %893 = vmatprep.subr.mxu0 0.0
    %894 = vmatpush2.msra.mxu0 0.0
    %895 = vmatprep.subr.mxu0 0.0
    %896 = vmatpush2.msra.mxu0 0.0
    %897 = vmatprep.subr.mxu0 0.0
    %898 = vmatpush2.msra.mxu0 0.0
    %899 = vmatprep.subr.mxu0 0.0
    %900 = vmatpush2.msra.mxu0 0.0
    %901 = vmatprep.subr.mxu0 0.0
    %902 = vmatpush2.msra.mxu0 0.0
    %903 = vmatprep.subr.mxu0 0.0
    %904 = vmatpush2.msra.mxu0 0.0
    %905 = vmatprep.subr.mxu0 0.0
    %906 = vmatpush2.msra.mxu0 0.0
    %907 = vmatprep.subr.mxu0 0.0
    %908 = vmatpush2.msra.mxu0 0.0
    %909 = vmatprep.subr.mxu0 0.0
    %910 = vmatpush2.msra.mxu0 0.0
    %911 = vmatprep.subr.mxu0 0.0
    %912 = vmatpush2.msra.mxu0 0.0
    %913 = vmatprep.subr.mxu0 0.0
    %914 = vmatpush2.msra.mxu0 0.0
    %915 = vmatprep.mubr.f32.mxu0 0.0
    %916 = vmatmul.mubr.f32.gmra.mxu0 %v848
    %v917 = vpop.f32.mrf.mxu0
    %v918 = vadd.f32 0.0, %v917
    %v919 = vpop.f32.mrf.mxu0
    %920 = vdwg.mxu0
    %v922 = vsel %vm181, %v850, 0
    %924 = vmatprep.subr.mxu0 0.0
    %925 = vmatpush1.msra.mxu0 0.0
    %926 = vmatprep.subr.mxu0 0.0
    %927 = vmatpush1.msra.mxu0 0.0
    %928 = vmatprep.subr.mxu0 0.0
    %929 = vmatpush1.msra.mxu0 0.0
    %930 = vmatprep.subr.mxu0 0.0
    %931 = vmatpush1.msra.mxu0 0.0
    %932 = vmatprep.subr.mxu0 0.0
    %933 = vmatpush1.msra.mxu0 0.0
    %934 = vmatprep.subr.mxu0 0.0
    %935 = vmatpush1.msra.mxu0 0.0
    %936 = vmatprep.subr.mxu0 0.0
    %937 = vmatpush1.msra.mxu0 0.0
    %938 = vmatprep.subr.mxu0 0.0
    %939 = vmatpush1.msra.mxu0 0.0
    %940 = vmatprep.subr.mxu0 0.0
    %941 = vmatpush1.msra.mxu0 %v187
    %942 = vmatprep.subr.mxu0 0.0
    %943 = vmatpush1.msra.mxu0 %v85
    %944 = vmatprep.subr.mxu0 0.0
    %945 = vmatpush1.msra.mxu0 %v84
    %946 = vmatprep.subr.mxu0 0.0
    %947 = vmatpush1.msra.mxu0 %v83
    %948 = vmatprep.subr.mxu0 0.0
    %949 = vmatpush1.msra.mxu0 %v82
    %950 = vmatprep.subr.mxu0 0.0
    %951 = vmatpush1.msra.mxu0 %v81
    %952 = vmatprep.subr.mxu0 0.0
    %953 = vmatpush1.msra.mxu0 %v80
    %954 = vmatprep.subr.mxu0 0.0
    %955 = vmatpush1.msra.mxu0 %v79
    %956 = vmatprep.subr.mxu0 0.0
    %957 = vmatpush2.msra.mxu0 0.0
    %958 = vmatprep.subr.mxu0 0.0
    %959 = vmatpush2.msra.mxu0 0.0
    %960 = vmatprep.subr.mxu0 0.0
    %961 = vmatpush2.msra.mxu0 0.0
    %962 = vmatprep.subr.mxu0 0.0
    %963 = vmatpush2.msra.mxu0 0.0
    %964 = vmatprep.subr.mxu0 0.0
    %965 = vmatpush2.msra.mxu0 0.0
    %966 = vmatprep.subr.mxu0 0.0
    %967 = vmatpush2.msra.mxu0 0.0
    %968 = vmatprep.subr.mxu0 0.0
    %969 = vmatpush2.msra.mxu0 0.0
    %970 = vmatprep.subr.mxu0 0.0
    %971 = vmatpush2.msra.mxu0 0.0
    %972 = vmatprep.subr.mxu0 0.0
    %973 = vmatpush2.msra.mxu0 0.0
    %974 = vmatprep.subr.mxu0 0.0
    %975 = vmatpush2.msra.mxu0 0.0
    %976 = vmatprep.subr.mxu0 0.0
    %977 = vmatpush2.msra.mxu0 0.0
    %978 = vmatprep.subr.mxu0 0.0
    %979 = vmatpush2.msra.mxu0 0.0
    %980 = vmatprep.subr.mxu0 0.0
    %981 = vmatpush2.msra.mxu0 0.0
    %982 = vmatprep.subr.mxu0 0.0
    %983 = vmatpush2.msra.mxu0 0.0
    %984 = vmatprep.subr.mxu0 0.0
    %985 = vmatpush2.msra.mxu0 0.0
    %986 = vmatprep.subr.mxu0 0.0
    %987 = vmatpush2.msra.mxu0 0.0
    %988 = vmatprep.mubr.f32.mxu0 0.0
    %989 = vmatmul.mubr.f32.gmra.mxu0 %v922
    %v990 = vpop.f32.mrf.mxu0
    %v991 = vadd.f32 %v918, %v990
    %v992 = vpop.f32.mrf.mxu0
    %993 = vdwg.mxu0
    %v994 = vadd.f32 %v991, %v108
    %v995 = vtanh.pop %v994
    %s996 = scalar_lea.vmem [#allocation2], 48
    %v997 = vld [vmem:[%s996] sm:$0xff]
    %998 = vmatprep.subr.mxu0 0.0
    %999 = vmatpush1.msra.mxu0 %v102
    %1000 = vmatprep.subr.mxu0 0.0
    %1001 = vmatpush1.msra.mxu0 %v101
    %1002 = vmatprep.subr.mxu0 0.0
    %1003 = vmatpush1.msra.mxu0 %v100
    %1004 = vmatprep.subr.mxu0 0.0
    %1005 = vmatpush1.msra.mxu0 %v99
    %1006 = vmatprep.subr.mxu0 0.0
    %1007 = vmatpush1.msra.mxu0 %v98
    %1008 = vmatprep.subr.mxu0 0.0
    %1009 = vmatpush1.msra.mxu0 %v97
    %1010 = vmatprep.subr.mxu0 0.0
    %1011 = vmatpush1.msra.mxu0 %v96
    %1012 = vmatprep.subr.mxu0 0.0
    %1013 = vmatpush1.msra.mxu0 %v95
    %1014 = vmatprep.subr.mxu0 0.0
    %1015 = vmatpush1.msra.mxu0 %v94
    %1016 = vmatprep.subr.mxu0 0.0
    %1017 = vmatpush1.msra.mxu0 %v93
    %1018 = vmatprep.subr.mxu0 0.0
    %1019 = vmatpush1.msra.mxu0 %v92
    %1020 = vmatprep.subr.mxu0 0.0
    %1021 = vmatpush1.msra.mxu0 %v91
    %1022 = vmatprep.subr.mxu0 0.0
    %1023 = vmatpush1.msra.mxu0 %v90
    %1024 = vmatprep.subr.mxu0 0.0
    %1025 = vmatpush1.msra.mxu0 %v89
    %1026 = vmatprep.subr.mxu0 0.0
    %1027 = vmatpush1.msra.mxu0 %v88
    %1028 = vmatprep.subr.mxu0 0.0
    %1029 = vmatpush1.msra.mxu0 %v87
    %1030 = vmatprep.subr.mxu0 0.0
    %1031 = vmatpush2.msra.mxu0 0.0
    %1032 = vmatprep.subr.mxu0 0.0
    %1033 = vmatpush2.msra.mxu0 0.0
    %1034 = vmatprep.subr.mxu0 0.0
    %1035 = vmatpush2.msra.mxu0 0.0
    %1036 = vmatprep.subr.mxu0 0.0
    %1037 = vmatpush2.msra.mxu0 0.0
    %1038 = vmatprep.subr.mxu0 0.0
    %1039 = vmatpush2.msra.mxu0 0.0
    %1040 = vmatprep.subr.mxu0 0.0
    %1041 = vmatpush2.msra.mxu0 0.0
    %1042 = vmatprep.subr.mxu0 0.0
    %1043 = vmatpush2.msra.mxu0 0.0
    %1044 = vmatprep.subr.mxu0 0.0
    %1045 = vmatpush2.msra.mxu0 0.0
    %1046 = vmatprep.subr.mxu0 0.0
    %1047 = vmatpush2.msra.mxu0 0.0
    %1048 = vmatprep.subr.mxu0 0.0
    %1049 = vmatpush2.msra.mxu0 0.0
    %1050 = vmatprep.subr.mxu0 0.0
    %1051 = vmatpush2.msra.mxu0 0.0
    %1052 = vmatprep.subr.mxu0 0.0
    %1053 = vmatpush2.msra.mxu0 0.0
    %1054 = vmatprep.subr.mxu0 0.0
    %1055 = vmatpush2.msra.mxu0 0.0
    %1056 = vmatprep.subr.mxu0 0.0
    %1057 = vmatpush2.msra.mxu0 0.0
    %1058 = vmatprep.subr.mxu0 0.0
    %1059 = vmatpush2.msra.mxu0 0.0
    %1060 = vmatprep.subr.mxu0 0.0
    %1061 = vmatpush2.msra.mxu0 0.0
    %1062 = vmatprep.mubr.f32.mxu0 0.0
    %1063 = vmatmul.mubr.f32.gmra.mxu0 %v995
    %v1064 = vpop.f32.mrf.mxu0
    %v1065 = vadd.f32 0.0, %v1064
    %v1066 = vpop.f32.mrf.mxu0
    %1067 = vdwg.mxu0
    %v1069 = vsel %vm181, %v997, 0
    %1071 = vmatprep.subr.mxu0 0.0
    %1072 = vmatpush1.msra.mxu0 0.0
    %1073 = vmatprep.subr.mxu0 0.0
    %1074 = vmatpush1.msra.mxu0 0.0
    %1075 = vmatprep.subr.mxu0 0.0
    %1076 = vmatpush1.msra.mxu0 0.0
    %1077 = vmatprep.subr.mxu0 0.0
    %1078 = vmatpush1.msra.mxu0 0.0
    %1079 = vmatprep.subr.mxu0 0.0
    %1080 = vmatpush1.msra.mxu0 0.0
    %1081 = vmatprep.subr.mxu0 0.0
    %1082 = vmatpush1.msra.mxu0 0.0
    %1083 = vmatprep.subr.mxu0 0.0
    %1084 = vmatpush1.msra.mxu0 0.0
    %1085 = vmatprep.subr.mxu0 0.0
    %1086 = vmatpush1.msra.mxu0 0.0
    %1087 = vmatprep.subr.mxu0 0.0
    %1088 = vmatpush1.msra.mxu0 %v187
    %1089 = vmatprep.subr.mxu0 0.0
    %1090 = vmatpush1.msra.mxu0 %v85
    %1091 = vmatprep.subr.mxu0 0.0
    %1092 = vmatpush1.msra.mxu0 %v84
    %1093 = vmatprep.subr.mxu0 0.0
    %1094 = vmatpush1.msra.mxu0 %v83
    %1095 = vmatprep.subr.mxu0 0.0
    %1096 = vmatpush1.msra.mxu0 %v82
    %1097 = vmatprep.subr.mxu0 0.0
    %1098 = vmatpush1.msra.mxu0 %v81
    %1099 = vmatprep.subr.mxu0 0.0
    %1100 = vmatpush1.msra.mxu0 %v80
    %1101 = vmatprep.subr.mxu0 0.0
    %1102 = vmatpush1.msra.mxu0 %v79
    %1103 = vmatprep.subr.mxu0 0.0
    %1104 = vmatpush2.msra.mxu0 0.0
    %1105 = vmatprep.subr.mxu0 0.0
    %1106 = vmatpush2.msra.mxu0 0.0
    %1107 = vmatprep.subr.mxu0 0.0
    %1108 = vmatpush2.msra.mxu0 0.0
    %1109 = vmatprep.subr.mxu0 0.0
    %1110 = vmatpush2.msra.mxu0 0.0
    %1111 = vmatprep.subr.mxu0 0.0
    %1112 = vmatpush2.msra.mxu0 0.0
    %1113 = vmatprep.subr.mxu0 0.0
    %1114 = vmatpush2.msra.mxu0 0.0
    %1115 = vmatprep.subr.mxu0 0.0
    %1116 = vmatpush2.msra.mxu0 0.0
    %1117 = vmatprep.subr.mxu0 0.0
    %1118 = vmatpush2.msra.mxu0 0.0
    %1119 = vmatprep.subr.mxu0 0.0
    %1120 = vmatpush2.msra.mxu0 0.0
    %1121 = vmatprep.subr.mxu0 0.0
    %1122 = vmatpush2.msra.mxu0 0.0
    %1123 = vmatprep.subr.mxu0 0.0
    %1124 = vmatpush2.msra.mxu0 0.0
    %1125 = vmatprep.subr.mxu0 0.0
    %1126 = vmatpush2.msra.mxu0 0.0
    %1127 = vmatprep.subr.mxu0 0.0
    %1128 = vmatpush2.msra.mxu0 0.0
    %1129 = vmatprep.subr.mxu0 0.0
    %1130 = vmatpush2.msra.mxu0 0.0
    %1131 = vmatprep.subr.mxu0 0.0
    %1132 = vmatpush2.msra.mxu0 0.0
    %1133 = vmatprep.subr.mxu0 0.0
    %1134 = vmatpush2.msra.mxu0 0.0
    %1135 = vmatprep.mubr.f32.mxu0 0.0
    %1136 = vmatmul.mubr.f32.gmra.mxu0 %v1069
    %v1137 = vpop.f32.mrf.mxu0
    %v1138 = vadd.f32 %v1065, %v1137
    %v1139 = vpop.f32.mrf.mxu0
    %1140 = vdwg.mxu0
    %v1141 = vadd.f32 %v1138, %v108
    %v1142 = vtanh.pop %v1141
    %s1143 = scalar_lea.vmem [#allocation2], 56
    %v1144 = vld [vmem:[%s1143] sm:$0xff]
    %1145 = vmatprep.subr.mxu0 0.0
    %1146 = vmatpush1.msra.mxu0 %v102
    %1147 = vmatprep.subr.mxu0 0.0
    %1148 = vmatpush1.msra.mxu0 %v101
    %1149 = vmatprep.subr.mxu0 0.0
    %1150 = vmatpush1.msra.mxu0 %v100
    %1151 = vmatprep.subr.mxu0 0.0
    %1152 = vmatpush1.msra.mxu0 %v99
    %1153 = vmatprep.subr.mxu0 0.0
    %1154 = vmatpush1.msra.mxu0 %v98
    %1155 = vmatprep.subr.mxu0 0.0
    %1156 = vmatpush1.msra.mxu0 %v97
    %1157 = vmatprep.subr.mxu0 0.0
    %1158 = vmatpush1.msra.mxu0 %v96
    %1159 = vmatprep.subr.mxu0 0.0
    %1160 = vmatpush1.msra.mxu0 %v95
    %1161 = vmatprep.subr.mxu0 0.0
    %1162 = vmatpush1.msra.mxu0 %v94
    %1163 = vmatprep.subr.mxu0 0.0
    %1164 = vmatpush1.msra.mxu0 %v93
    %1165 = vmatprep.subr.mxu0 0.0
    %1166 = vmatpush1.msra.mxu0 %v92
    %1167 = vmatprep.subr.mxu0 0.0
    %1168 = vmatpush1.msra.mxu0 %v91
    %1169 = vmatprep.subr.mxu0 0.0
    %1170 = vmatpush1.msra.mxu0 %v90
    %1171 = vmatprep.subr.mxu0 0.0
    %1172 = vmatpush1.msra.mxu0 %v89
    %1173 = vmatprep.subr.mxu0 0.0
    %1174 = vmatpush1.msra.mxu0 %v88
    %1175 = vmatprep.subr.mxu0 0.0
    %1176 = vmatpush1.msra.mxu0 %v87
    %1177 = vmatprep.subr.mxu0 0.0
    %1178 = vmatpush2.msra.mxu0 0.0
    %1179 = vmatprep.subr.mxu0 0.0
    %1180 = vmatpush2.msra.mxu0 0.0
    %1181 = vmatprep.subr.mxu0 0.0
    %1182 = vmatpush2.msra.mxu0 0.0
    %1183 = vmatprep.subr.mxu0 0.0
    %1184 = vmatpush2.msra.mxu0 0.0
    %1185 = vmatprep.subr.mxu0 0.0
    %1186 = vmatpush2.msra.mxu0 0.0
    %1187 = vmatprep.subr.mxu0 0.0
    %1188 = vmatpush2.msra.mxu0 0.0
    %1189 = vmatprep.subr.mxu0 0.0
    %1190 = vmatpush2.msra.mxu0 0.0
    %1191 = vmatprep.subr.mxu0 0.0
    %1192 = vmatpush2.msra.mxu0 0.0
    %1193 = vmatprep.subr.mxu0 0.0
    %1194 = vmatpush2.msra.mxu0 0.0
    %1195 = vmatprep.subr.mxu0 0.0
    %1196 = vmatpush2.msra.mxu0 0.0
    %1197 = vmatprep.subr.mxu0 0.0
    %1198 = vmatpush2.msra.mxu0 0.0
    %1199 = vmatprep.subr.mxu0 0.0
    %1200 = vmatpush2.msra.mxu0 0.0
    %1201 = vmatprep.subr.mxu0 0.0
    %1202 = vmatpush2.msra.mxu0 0.0
    %1203 = vmatprep.subr.mxu0 0.0
    %1204 = vmatpush2.msra.mxu0 0.0
    %1205 = vmatprep.subr.mxu0 0.0
    %1206 = vmatpush2.msra.mxu0 0.0
    %1207 = vmatprep.subr.mxu0 0.0
    %1208 = vmatpush2.msra.mxu0 0.0
    %1209 = vmatprep.mubr.f32.mxu0 0.0
    %1210 = vmatmul.mubr.f32.gmra.mxu0 %v1142
    %v1211 = vpop.f32.mrf.mxu0
    %v1212 = vadd.f32 0.0, %v1211
    %v1213 = vpop.f32.mrf.mxu0
    %1214 = vdwg.mxu0
    %v1216 = vsel %vm181, %v1144, 0
    %1218 = vmatprep.subr.mxu0 0.0
    %1219 = vmatpush1.msra.mxu0 0.0
    %1220 = vmatprep.subr.mxu0 0.0
    %1221 = vmatpush1.msra.mxu0 0.0
    %1222 = vmatprep.subr.mxu0 0.0
    %1223 = vmatpush1.msra.mxu0 0.0
    %1224 = vmatprep.subr.mxu0 0.0
    %1225 = vmatpush1.msra.mxu0 0.0
    %1226 = vmatprep.subr.mxu0 0.0
    %1227 = vmatpush1.msra.mxu0 0.0
    %1228 = vmatprep.subr.mxu0 0.0
    %1229 = vmatpush1.msra.mxu0 0.0
    %1230 = vmatprep.subr.mxu0 0.0
    %1231 = vmatpush1.msra.mxu0 0.0
    %1232 = vmatprep.subr.mxu0 0.0
    %1233 = vmatpush1.msra.mxu0 0.0
    %1234 = vmatprep.subr.mxu0 0.0
    %1235 = vmatpush1.msra.mxu0 %v187
    %1236 = vmatprep.subr.mxu0 0.0
    %1237 = vmatpush1.msra.mxu0 %v85
    %1238 = vmatprep.subr.mxu0 0.0
    %1239 = vmatpush1.msra.mxu0 %v84
    %1240 = vmatprep.subr.mxu0 0.0
    %1241 = vmatpush1.msra.mxu0 %v83
    %1242 = vmatprep.subr.mxu0 0.0
    %1243 = vmatpush1.msra.mxu0 %v82
    %1244 = vmatprep.subr.mxu0 0.0
    %1245 = vmatpush1.msra.mxu0 %v81
    %1246 = vmatprep.subr.mxu0 0.0
    %1247 = vmatpush1.msra.mxu0 %v80
    %1248 = vmatprep.subr.mxu0 0.0
    %1249 = vmatpush1.msra.mxu0 %v79
    %1250 = vmatprep.subr.mxu0 0.0
    %1251 = vmatpush2.msra.mxu0 0.0
    %1252 = vmatprep.subr.mxu0 0.0
    %1253 = vmatpush2.msra.mxu0 0.0
    %1254 = vmatprep.subr.mxu0 0.0
    %1255 = vmatpush2.msra.mxu0 0.0
    %1256 = vmatprep.subr.mxu0 0.0
    %1257 = vmatpush2.msra.mxu0 0.0
    %1258 = vmatprep.subr.mxu0 0.0
    %1259 = vmatpush2.msra.mxu0 0.0
    %1260 = vmatprep.subr.mxu0 0.0
    %1261 = vmatpush2.msra.mxu0 0.0
    %1262 = vmatprep.subr.mxu0 0.0
    %1263 = vmatpush2.msra.mxu0 0.0
    %1264 = vmatprep.subr.mxu0 0.0
    %1265 = vmatpush2.msra.mxu0 0.0
    %1266 = vmatprep.subr.mxu0 0.0
    %1267 = vmatpush2.msra.mxu0 0.0
    %1268 = vmatprep.subr.mxu0 0.0
    %1269 = vmatpush2.msra.mxu0 0.0
    %1270 = vmatprep.subr.mxu0 0.0
    %1271 = vmatpush2.msra.mxu0 0.0
    %1272 = vmatprep.subr.mxu0 0.0
    %1273 = vmatpush2.msra.mxu0 0.0
    %1274 = vmatprep.subr.mxu0 0.0
    %1275 = vmatpush2.msra.mxu0 0.0
    %1276 = vmatprep.subr.mxu0 0.0
    %1277 = vmatpush2.msra.mxu0 0.0
    %1278 = vmatprep.subr.mxu0 0.0
    %1279 = vmatpush2.msra.mxu0 0.0
    %1280 = vmatprep.subr.mxu0 0.0
    %1281 = vmatpush2.msra.mxu0 0.0
    %1282 = vmatprep.mubr.f32.mxu0 0.0
    %1283 = vmatmul.mubr.f32.gmra.mxu0 %v1216
    %v1284 = vpop.f32.mrf.mxu0
    %v1285 = vadd.f32 %v1212, %v1284
    %v1286 = vpop.f32.mrf.mxu0
    %1287 = vdwg.mxu0
    %v1288 = vadd.f32 %v1285, %v108
    %v1289 = vtanh.pop %v1288
    %v1290 = vld [vmem:[#allocation8] sm:$0xff]
    %v1291 = vld [vmem:[#allocation8 + $0x8] sm:$0xff]
    %v1292 = vld [vmem:[#allocation8 + $0x10] sm:$0xff]
    %v1293 = vld [vmem:[#allocation8 + $0x18] sm:$0xff]
    %v1294 = vld [vmem:[#allocation8 + $0x20] sm:$0xff]
    %v1295 = vld [vmem:[#allocation8 + $0x28] sm:$0xff]
    %v1296 = vld [vmem:[#allocation8 + $0x30] sm:$0xff]
    %v1297 = vld [vmem:[#allocation8 + $0x38] sm:$0xff]
    %v1298 = vld [vmem:[#allocation8 + $0x40] sm:$0xff]
    %v1299 = vld [vmem:[#allocation8 + $0x48] sm:$0xff]
    %v1300 = vld [vmem:[#allocation8 + $0x50] sm:$0xff]
    %v1301 = vld [vmem:[#allocation8 + $0x58] sm:$0xff]
    %v1302 = vld [vmem:[#allocation8 + $0x60] sm:$0xff]
    %v1303 = vld [vmem:[#allocation8 + $0x68] sm:$0xff]
    %v1304 = vld [vmem:[#allocation8 + $0x70] sm:$0xff]
    %v1305 = vld [vmem:[#allocation8 + $0x78] sm:$0xff]
    %v1306 = vld [vmem:[%s5] sm:$0x1]
    %v1308 = vlaneseq
    %v1309 = vshrl.u32 %v1308, 7
    %v1310 = vsub.s32 0, %v1309
    %v1311 = vrot.slane %v1306, %v1310
    %1313 = vmatprep.subr.mxu0 0.0
    %1314 = vmatpush1.msra.mxu0 %v1305
    %1315 = vmatprep.subr.mxu0 0.0
    %1316 = vmatpush1.msra.mxu0 %v1304
    %1317 = vmatprep.subr.mxu0 0.0
    %1318 = vmatpush1.msra.mxu0 %v1303
    %1319 = vmatprep.subr.mxu0 0.0
    %1320 = vmatpush1.msra.mxu0 %v1302
    %1321 = vmatprep.subr.mxu0 0.0
    %1322 = vmatpush1.msra.mxu0 %v1301
    %1323 = vmatprep.subr.mxu0 0.0
    %1324 = vmatpush1.msra.mxu0 %v1300
    %1325 = vmatprep.subr.mxu0 0.0
    %1326 = vmatpush1.msra.mxu0 %v1299
    %1327 = vmatprep.subr.mxu0 0.0
    %1328 = vmatpush1.msra.mxu0 %v1298
    %1329 = vmatprep.subr.mxu0 0.0
    %1330 = vmatpush1.msra.mxu0 %v1297
    %1331 = vmatprep.subr.mxu0 0.0
    %1332 = vmatpush1.msra.mxu0 %v1296
    %1333 = vmatprep.subr.mxu0 0.0
    %1334 = vmatpush1.msra.mxu0 %v1295
    %1335 = vmatprep.subr.mxu0 0.0
    %1336 = vmatpush1.msra.mxu0 %v1294
    %1337 = vmatprep.subr.mxu0 0.0
    %1338 = vmatpush1.msra.mxu0 %v1293
    %1339 = vmatprep.subr.mxu0 0.0
    %1340 = vmatpush1.msra.mxu0 %v1292
    %1341 = vmatprep.subr.mxu0 0.0
    %1342 = vmatpush1.msra.mxu0 %v1291
    %1343 = vmatprep.subr.mxu0 0.0
    %1344 = vmatpush1.msra.mxu0 %v1290
    %1345 = vmatprep.subr.mxu0 0.0
    %1346 = vmatpush2.msra.mxu0 0.0
    %1347 = vmatprep.subr.mxu0 0.0
    %1348 = vmatpush2.msra.mxu0 0.0
    %1349 = vmatprep.subr.mxu0 0.0
    %1350 = vmatpush2.msra.mxu0 0.0
    %1351 = vmatprep.subr.mxu0 0.0
    %1352 = vmatpush2.msra.mxu0 0.0
    %1353 = vmatprep.subr.mxu0 0.0
    %1354 = vmatpush2.msra.mxu0 0.0
    %1355 = vmatprep.subr.mxu0 0.0
    %1356 = vmatpush2.msra.mxu0 0.0
    %1357 = vmatprep.subr.mxu0 0.0
    %1358 = vmatpush2.msra.mxu0 0.0
    %1359 = vmatprep.subr.mxu0 0.0
    %1360 = vmatpush2.msra.mxu0 0.0
    %1361 = vmatprep.subr.mxu0 0.0
    %1362 = vmatpush2.msra.mxu0 0.0
    %1363 = vmatprep.subr.mxu0 0.0
    %1364 = vmatpush2.msra.mxu0 0.0
    %1365 = vmatprep.subr.mxu0 0.0
    %1366 = vmatpush2.msra.mxu0 0.0
    %1367 = vmatprep.subr.mxu0 0.0
    %1368 = vmatpush2.msra.mxu0 0.0
    %1369 = vmatprep.subr.mxu0 0.0
    %1370 = vmatpush2.msra.mxu0 0.0
    %1371 = vmatprep.subr.mxu0 0.0
    %1372 = vmatpush2.msra.mxu0 0.0
    %1373 = vmatprep.subr.mxu0 0.0
    %1374 = vmatpush2.msra.mxu0 0.0
    %1375 = vmatprep.subr.mxu0 0.0
    %1376 = vmatpush2.msra.mxu0 0.0
    %1377 = vmatprep.mubr.f32.mxu0 0.0
    %1378 = vmatmul.mubr.f32.gmra.mxu0 %v1289
    %v1379 = vpop.f32.mrf.mxu0
    %v1380 = vadd.f32 %v1311, %v1379
    %v1381 = vpop.f32.mrf.mxu0
    %1382 = vdwg.mxu0
    %1383 = vmax.xlane.f32.xlu0 %v1380
    %v1384 = vpop.xlane.xlu0 %1383
    %v1385 = vsub.f32 %v1380, %v1384
    %v1386 = vmul.f32 %v1385, 1.442695
    %v1387 = vpow.pop %v1386
    %1388 = vadd.xlane.f32.xlu0 %v1387
    %v1389 = vpop.xlane.xlu0 %1388
    %v1390 = vlog2.pop %v1389
    %v1391 = vmul.f32 %v1390, 0.6931472
    %v1392 = vadd.f32 %v1391, %v1384
    %v1393 = vsub.f32 %v1380, %v1392
    %1394 = vst [vmem:[#allocation10] sm:$0xff] %v1393
    // Predicated region
    $region42: #{tpu_custom_call.1} parent=1 // pred_check
      _
    $region43: #{tpu_custom_call.1} parent=1 // pred_check_branch
      %1396 = sbr.rel (0) target = $region45
    $region44: #{tpu_custom_call.1} parent=1 // pred_region
      %s1398 = ssub.s32 128, 128
      %1399 = vsyncadd [#allocation4], %s1398
      %s1401 = sshll.u32 [#allocation10], 4
      %s1402 = int_to_ptr.vmem [resolvable:$true] %s1401
      %1404 = dma.vmem_to_hbm [thread:$0]  %s1402, 128, %s6, [#allocation4]
    $region45: #{tpu_custom_call.1} parent=1 // pred_fallthru
      _
    // Predicated region
    $region46: #{tpu_custom_call.1} parent=1 // pred_check
      _
    $region47: #{tpu_custom_call.1} parent=1 // pred_check_branch
      %1406 = sbr.rel (0) target = $region49
    $region48: #{tpu_custom_call.1} parent=1 // pred_region
      %1407 = dma.done [#allocation4], 128
    $region49: #{tpu_custom_call.1} parent=1 // pred_fallthru
      _
    %1408 = vsyncpa [#allocation3], 1
    %1409 = vsyncpa [#allocation6], 1
    %1410 = vsyncpa [#allocation9], 1
    %1411 = vsyncpa [#allocation4], 1

</llo_original>
